<compile_context>
chip_gen: v7x
topology: tpu7x:2x2x1
jax: 0.10.0
libtpu: 0.0.40
codegen_flags: <defaults>
</compile_context>

<pallas_src>
import functools

import jax
import jax.numpy as jnp
from jax import lax
from jax.experimental import pallas as pl
from jax.experimental.pallas import tpu as pltpu


# ----------------------------------------------------------------------------
# Fused kernel on a channels-major slab.
#   x_ref  : (c1, L)          VMEM   L = B_TILE * H * W (lane axis)
#   m_ref  : (9, L)           VMEM   precomputed 0/1 zero-padding masks per tap
#   w1_ref : (c_mid, c1)      VMEM   folded cv1 + BN1 weights
#   b1_ref : (c_mid, 1)       VMEM   folded bias
#   w2_ref : (9, c2, c_mid)   VMEM   folded cv2 + BN2 weights, dense per tap
#                                    (block-diagonal over groups)
#   b2_ref : (c2, 1)          VMEM   folded bias
#   o_ref  : (c2, L)          VMEM
# ----------------------------------------------------------------------------
def _bottleneck_kernel(x_ref, m_ref, w1_ref, b1_ref, w2_ref, b2_ref, o_ref, *,
                       h, w, add):
    x = x_ref[...]                                           # (c1, L) f32
    L = x.shape[1]

    # ---- cv1: 1x1 conv (+folded BN) as a single MXU matmul, then SiLU -------
    y = jnp.dot(w1_ref[...], x, preferred_element_type=jnp.float32)
    y = y + b1_ref[...]
    y = y * jax.nn.sigmoid(y)                                # (c_mid, L)

    # ---- cv2: 3x3 conv (+folded BN) as 9 accumulated MXU matmuls ------------
    # Tap t (dh, dw): shift by d = dh*w + dw on the flattened spatial axis.
    # Blocks contain whole H*W planes, so a circular roll never leaks between
    # images at unmasked positions; zero padding comes from the mask.
    m = m_ref[...]                                           # (9, L)
    acc = None
    t = 0
    for dh in (-1, 0, 1):
        for dw in (-1, 0, 1):
            d = dh * w + dw
            tap = y if d == 0 else pltpu.roll(y, (-d) % L, 1)
            tap = tap * m[t:t + 1, :]                        # in-register padding
            contrib = jnp.dot(w2_ref[t], tap,
                              preferred_element_type=jnp.float32)
            acc = contrib if acc is None else acc + contrib  # init from 1st tap
            t += 1

    out = acc + b2_ref[...]
    out = out * jax.nn.sigmoid(out)                          # SiLU
    if add:
        out = out + x                                        # identity residual
    o_ref[...] = out                                         # lane-dense store


# ----------------------------------------------------------------------------
# Parameter init (same tensor shapes as the PyTorch module).
# ----------------------------------------------------------------------------
def init_bottleneck_params(key, c1, c2, g=1, e=0.5):
    c_ = int(c2 * e)
    ks = jax.random.split(key, 10)

    def unif(k, shape, lo=-0.3, hi=0.3):
        return jax.random.uniform(k, shape, jnp.float32, lo, hi)

    return {
        "cv1_w": unif(ks[0], (c_, c1, 1, 1)),           # Conv2d(c1, c_, 1), bias=False
        "bn1_gamma": unif(ks[1], (c_,), 0.5, 1.5),
        "bn1_beta": unif(ks[2], (c_,)),
        "bn1_mean": unif(ks[3], (c_,)),
        "bn1_var": unif(ks[4], (c_,), 0.5, 1.5),
        "cv2_w": unif(ks[5], (c2, c_ // g, 3, 3)),      # Conv2d(c_, c2, 3, groups=g)
        "bn2_gamma": unif(ks[6], (c2,), 0.5, 1.5),
        "bn2_beta": unif(ks[7], (c2,)),
        "bn2_mean": unif(ks[8], (c2,)),
        "bn2_var": unif(ks[9], (c2,), 0.5, 1.5),
    }


# ----------------------------------------------------------------------------
# Inference-mode BN folding + kernel-friendly weight layout.
#   w1: (c_mid, c1); b1: (c_mid, 1)
#   w2: (9, c2, c_mid) dense per tap (grouped conv expanded block-diagonally)
# ----------------------------------------------------------------------------
def fold_bottleneck_params(p, g=1, eps=1e-5):
    s1 = p["bn1_gamma"] / jnp.sqrt(p["bn1_var"] + eps)
    w1 = p["cv1_w"][:, :, 0, 0] * s1[:, None]                 # (c_mid, c1)
    b1 = p["bn1_beta"] - p["bn1_mean"] * s1                   # (c_mid,)

    s2 = p["bn2_gamma"] / jnp.sqrt(p["bn2_var"] + eps)
    w2 = p["cv2_w"] * s2[:, None, None, None]                 # (c2, c_mid/g, 3, 3)
    c2, cpg_in, _, _ = w2.shape
    c_mid = cpg_in * g
    cpg_out = c2 // g

    dense = jnp.zeros((c2, c_mid, 3, 3), jnp.float32)         # block-diag over groups
    for gi in range(g):
        o0, i0 = gi * cpg_out, gi * cpg_in
        dense = dense.at[o0:o0 + cpg_out, i0:i0 + cpg_in].set(w2[o0:o0 + cpg_out])
    # tap order (kh*3 + kw) == (dh, dw) row-major order used in the kernel
    w2_taps = jnp.transpose(dense, (2, 3, 0, 1)).reshape(9, c2, c_mid)

    b2 = p["bn2_beta"] - p["bn2_mean"] * s2                   # (c2,)
    return {"w1": w1, "b1": b1[:, None], "w2": w2_taps, "b2": b2[:, None]}


# ----------------------------------------------------------------------------
# Forward wrapper. Input/output NCHW to match the PyTorch module.
# ----------------------------------------------------------------------------
def bottleneck_forward(x_nchw, folded, *, shortcut=True):
    n, c1, h, w = x_nchw.shape
    c_mid = folded["w1"].shape[0]
    c2 = folded["w2"].shape[1]
    hw = h * w
    add = bool(shortcut and c1 == c2)

    # Channels-major slab: channels on sublanes, batch*spatial lane-dense.
    x_cl = jnp.transpose(x_nchw, (1, 0, 2, 3)).reshape(c1, n * hw)
    x_cl = x_cl.astype(jnp.float32)

    # Batch tile: largest divisor of n whose block stays around ~2 MiB so each
    # grid step moves substantial DMAs instead of per-step overhead.
    img_bytes = max(c1, c2, c_mid) * hw * 4
    bt = max(1, min(n, (2 << 20) // max(img_bytes, 1)))
    while n % bt:
        bt -= 1
    L_blk = bt * hw
    grid = (n // bt,)
    # Blocks must contain whole H*W planes (roll+mask exactness) and, when the
    # grid has more than one step, L_blk must be a multiple of 128.
    assert grid[0] == 1 or (hw % 128 == 0), "H*W must be a multiple of 128 when tiling"
    # TODO(synk): for large images add H-row spatial tiling with a 1-row halo
    # (overlapping index_map) so a single (c, H*W) plane never has to fit VMEM.

    # Precomputed 0/1 zero-padding masks for the 9 taps, tiled over the batch tile.
    rows = jnp.arange(hw, dtype=jnp.int32) // w
    cols = jnp.arange(hw, dtype=jnp.int32) % w
    masks = []
    for dh in (-1, 0, 1):
        for dw in (-1, 0, 1):
            valid = ((rows + dh >= 0) & (rows + dh < h) &
                     (cols + dw >= 0) & (cols + dw < w))
            masks.append(valid.astype(jnp.float32))
    mask_blk = jnp.tile(jnp.stack(masks), (1, bt))            # (9, L_blk)

    kernel = functools.partial(_bottleneck_kernel, h=h, w=w, add=add)

    # VMEM budget: double-buffered x/out blocks + resident mask/weights +
    # intermediates (y, one tap, acc). Clamp to v7x's 64 MiB physical VMEM.
    vmem_est = 4 * L_blk * (2 * (c1 + c2) + 9 + 2 * c_mid + 2 * c2) + (1 << 20)
    vmem_limit = int(min(max(vmem_est, 8 << 20), 64 << 20))

    out = pl.pallas_call(
        kernel,
        out_shape=jax.ShapeDtypeStruct((c2, n * hw), jnp.float32),
        grid=grid,
        in_specs=[
            pl.BlockSpec((c1, L_blk), lambda i: (0, i)),           # x slab
            pl.BlockSpec((9, L_blk), lambda i: (0, 0)),            # tap masks (resident)
            pl.BlockSpec((c_mid, c1), lambda i: (0, 0)),           # w1
            pl.BlockSpec((c_mid, 1), lambda i: (0, 0)),            # b1
            pl.BlockSpec((9, c2, c_mid), lambda i: (0, 0, 0)),     # w2 per tap
            pl.BlockSpec((c2, 1), lambda i: (0, 0)),               # b2
        ],
        out_specs=pl.BlockSpec((c2, L_blk), lambda i: (0, i)),
        compiler_params=pltpu.CompilerParams(
            dimension_semantics=("parallel",),   # TODO(synk): CORE_PARALLEL on v7x
            vmem_limit_bytes=vmem_limit),        # once grid >= num TensorCores
    )(x_cl, mask_blk, folded["w1"], folded["b1"], folded["w2"], folded["b2"])

    return jnp.transpose(out.reshape(c2, n, h, w), (1, 0, 2, 3))


# ----------------------------------------------------------------------------
# Plain-JAX reference (un-folded, inference-mode BN) for verification only.
# ----------------------------------------------------------------------------
def reference_bottleneck(x, p, g=1, shortcut=True, eps=1e-5):
    def bn(y, gmm, bta, mean, var):
        c = lambda a: a[None, :, None, None]
        return (y - c(mean)) / jnp.sqrt(c(var) + eps) * c(gmm) + c(bta)

    def silu(y):
        return y * jax.nn.sigmoid(y)

    y = lax.conv_general_dilated(
        x, p["cv1_w"], (1, 1), ((0, 0), (0, 0)),
        dimension_numbers=("NCHW", "OIHW", "NCHW"),
        precision=lax.Precision.HIGHEST)
    y = silu(bn(y, p["bn1_gamma"], p["bn1_beta"], p["bn1_mean"], p["bn1_var"]))

    y = lax.conv_general_dilated(
        y, p["cv2_w"], (1, 1), ((1, 1), (1, 1)),
        dimension_numbers=("NCHW", "OIHW", "NCHW"),
        feature_group_count=g, precision=lax.Precision.HIGHEST)
    y = silu(bn(y, p["bn2_gamma"], p["bn2_beta"], p["bn2_mean"], p["bn2_var"]))

    return x + y if (shortcut and x.shape[1] == y.shape[1]) else y


if __name__ == "__main__":
    key = jax.random.PRNGKey(0)
    kx, kp1, kp2, kp3 = jax.random.split(key, 4)

    x = jax.random.normal(kx, (2, 4, 16, 16), jnp.float32)   # NCHW, like PyTorch

    # Case 1: c1 == c2, shortcut=True -> identity residual path (c_ = 2).
    p1 = init_bottleneck_params(kp1, c1=4, c2=4, g=1, e=0.5)
    f1 = fold_bottleneck_params(p1, g=1)
    y1 = jax.block_until_ready(bottleneck_forward(x, f1, shortcut=True))
    r1 = reference_bottleneck(x, p1, g=1, shortcut=True)
    assert y1.shape == (2, 4, 16, 16), y1.shape
    assert jnp.allclose(y1, r1, atol=1e-3, rtol=1e-3), float(jnp.max(jnp.abs(y1 - r1)))

    # Case 2: c1 != c2 -> no residual add (c_ = 4).
    p2 = init_bottleneck_params(kp2, c1=4, c2=8, g=1, e=0.5)
    f2 = fold_bottleneck_params(p2, g=1)
    y2 = jax.block_until_ready(bottleneck_forward(x, f2, shortcut=True))
    r2 = reference_bottleneck(x, p2, g=1, shortcut=True)
    assert y2.shape == (2, 8, 16, 16), y2.shape
    assert jnp.allclose(y2, r2, atol=1e-3, rtol=1e-3), float(jnp.max(jnp.abs(y2 - r2)))

    # Case 3: grouped cv2 (g=2) -> block-diagonal dense-weight expansion path.
    p3 = init_bottleneck_params(kp3, c1=4, c2=8, g=2, e=0.5)
    f3 = fold_bottleneck_params(p3, g=2)
    y3 = jax.block_until_ready(bottleneck_forward(x, f3, shortcut=True))
    r3 = reference_bottleneck(x, p3, g=2, shortcut=True)
    assert y3.shape == (2, 8, 16, 16), y3.shape
    assert jnp.allclose(y3, r3, atol=1e-3, rtol=1e-3), float(jnp.max(jnp.abs(y3 - r3)))

    print("KERNEL_OK")
</pallas_src>

<mosaic_0001>
module attributes {stable_mosaic.version = 11 : i64} {
  func.func @_bottleneck_kernel(%arg0: i32, %arg1: memref<4x512xf32, #tpu.memory_space<vmem>>, %arg2: memref<9x512xf32, #tpu.memory_space<vmem>>, %arg3: memref<2x4xf32, #tpu.memory_space<vmem>>, %arg4: memref<2x1xf32, #tpu.memory_space<vmem>>, %arg5: memref<9x4x2xf32, #tpu.memory_space<vmem>>, %arg6: memref<4x1xf32, #tpu.memory_space<vmem>>, %arg7: memref<4x512xf32, #tpu.memory_space<vmem>>) attributes {dimension_semantics = [#tpu.dimension_semantics<parallel>], iteration_bounds = array<i64: 1>, scalar_prefetch = 0 : i64, scratch_operands = 0 : i64, tpu.core_type = #tpu.core_type<tc>, window_params = [{transform_indices = @transform_0, window_bounds = array<i64: 4, 512>}, {pipeline_mode = #tpu.pipeline_mode<synchronous>, transform_indices = @transform_1, window_bounds = array<i64: 9, 512>}, {pipeline_mode = #tpu.pipeline_mode<synchronous>, transform_indices = @transform_2, window_bounds = array<i64: 2, 4>}, {pipeline_mode = #tpu.pipeline_mode<synchronous>, transform_indices = @transform_3, window_bounds = array<i64: 2, 1>}, {pipeline_mode = #tpu.pipeline_mode<synchronous>, transform_indices = @transform_4, window_bounds = array<i64: 9, 4, 2>}, {pipeline_mode = #tpu.pipeline_mode<synchronous>, transform_indices = @transform_5, window_bounds = array<i64: 4, 1>}, {transform_indices = @transform_6, window_bounds = array<i64: 4, 512>}]} {
    %c0 = arith.constant 0 : index
    %c0_0 = arith.constant 0 : index
    %0 = vector.load %arg1[%c0, %c0_0] : memref<4x512xf32, #tpu.memory_space<vmem>>, vector<4x512xf32>
    %c0_1 = arith.constant 0 : index
    %c0_2 = arith.constant 0 : index
    %1 = vector.load %arg3[%c0_1, %c0_2] : memref<2x4xf32, #tpu.memory_space<vmem>>, vector<2x4xf32>
    %cst = arith.constant dense<0.000000e+00> : vector<2x512xf32>
    %2 = tpu.matmul %1, %0, %cst {dimension_numbers = #tpu.dot_dimension_numbers<[1], [0], [0], [1], [0, 0, 1, 1], [], []>} : vector<2x4xf32>, vector<4x512xf32>, vector<2x512xf32> -> vector<2x512xf32>
    %c0_3 = arith.constant 0 : index
    %c0_4 = arith.constant 0 : index
    %3 = vector.load %arg4[%c0_3, %c0_4] : memref<2x1xf32, #tpu.memory_space<vmem>>, vector<2x1xf32>
    %4 = vector.broadcast %3 : vector<2x1xf32> to vector<2x512xf32>
    %5 = arith.addf %2, %4 : vector<2x512xf32>
    %6 = arith.negf %5 : vector<2x512xf32>
    %7 = math.exp %6 : vector<2x512xf32>
    %cst_5 = arith.constant 1.000000e+00 : f32
    %8 = vector.broadcast %cst_5 : f32 to vector<2x512xf32>
    %9 = arith.addf %8, %7 : vector<2x512xf32>
    %10 = arith.divf %8, %9 : vector<2x512xf32>
    %11 = arith.mulf %5, %10 : vector<2x512xf32>
    %c0_6 = arith.constant 0 : index
    %c0_7 = arith.constant 0 : index
    %12 = vector.load %arg2[%c0_6, %c0_7] : memref<9x512xf32, #tpu.memory_space<vmem>>, vector<9x512xf32>
    %c17_i32 = arith.constant 17 : i32
    %13 = tpu.dynamic_rotate %11 by %c17_i32 dim 1 : vector<2x512xf32>, i32 -> vector<2x512xf32>
    %14 = vector.extract_strided_slice %12 {offsets = [0, 0], sizes = [1, 512], strides = [1, 1]} : vector<9x512xf32> to vector<1x512xf32>
    %15 = vector.broadcast %14 : vector<1x512xf32> to vector<2x512xf32>
    %16 = arith.mulf %13, %15 : vector<2x512xf32>
    %c0_8 = arith.constant 0 : index
    %c0_9 = arith.constant 0 : index
    %c0_10 = arith.constant 0 : index
    %17 = vector.load %arg5[%c0_8, %c0_9, %c0_10] : memref<9x4x2xf32, #tpu.memory_space<vmem>>, vector<1x4x2xf32>
    %18 = vector.shape_cast %17 : vector<1x4x2xf32> to vector<4x2xf32>
    %cst_11 = arith.constant dense<0.000000e+00> : vector<4x512xf32>
    %19 = tpu.matmul %18, %16, %cst_11 {dimension_numbers = #tpu.dot_dimension_numbers<[1], [0], [0], [1], [0, 0, 1, 1], [], []>} : vector<4x2xf32>, vector<2x512xf32>, vector<4x512xf32> -> vector<4x512xf32>
    %c16_i32 = arith.constant 16 : i32
    %20 = tpu.dynamic_rotate %11 by %c16_i32 dim 1 : vector<2x512xf32>, i32 -> vector<2x512xf32>
    %21 = vector.extract_strided_slice %12 {offsets = [1, 0], sizes = [1, 512], strides = [1, 1]} : vector<9x512xf32> to vector<1x512xf32>
    %22 = vector.broadcast %21 : vector<1x512xf32> to vector<2x512xf32>
    %23 = arith.mulf %20, %22 : vector<2x512xf32>
    %c1 = arith.constant 1 : index
    %c0_12 = arith.constant 0 : index
    %c0_13 = arith.constant 0 : index
    %24 = vector.load %arg5[%c1, %c0_12, %c0_13] : memref<9x4x2xf32, #tpu.memory_space<vmem>>, vector<1x4x2xf32>
    %25 = vector.shape_cast %24 : vector<1x4x2xf32> to vector<4x2xf32>
    %cst_14 = arith.constant dense<0.000000e+00> : vector<4x512xf32>
    %26 = tpu.matmul %25, %23, %cst_14 {dimension_numbers = #tpu.dot_dimension_numbers<[1], [0], [0], [1], [0, 0, 1, 1], [], []>} : vector<4x2xf32>, vector<2x512xf32>, vector<4x512xf32> -> vector<4x512xf32>
    %27 = arith.addf %19, %26 : vector<4x512xf32>
    %c15_i32 = arith.constant 15 : i32
    %28 = tpu.dynamic_rotate %11 by %c15_i32 dim 1 : vector<2x512xf32>, i32 -> vector<2x512xf32>
    %29 = vector.extract_strided_slice %12 {offsets = [2, 0], sizes = [1, 512], strides = [1, 1]} : vector<9x512xf32> to vector<1x512xf32>
    %30 = vector.broadcast %29 : vector<1x512xf32> to vector<2x512xf32>
    %31 = arith.mulf %28, %30 : vector<2x512xf32>
    %c2 = arith.constant 2 : index
    %c0_15 = arith.constant 0 : index
    %c0_16 = arith.constant 0 : index
    %32 = vector.load %arg5[%c2, %c0_15, %c0_16] : memref<9x4x2xf32, #tpu.memory_space<vmem>>, vector<1x4x2xf32>
    %33 = vector.shape_cast %32 : vector<1x4x2xf32> to vector<4x2xf32>
    %cst_17 = arith.constant dense<0.000000e+00> : vector<4x512xf32>
    %34 = tpu.matmul %33, %31, %cst_17 {dimension_numbers = #tpu.dot_dimension_numbers<[1], [0], [0], [1], [0, 0, 1, 1], [], []>} : vector<4x2xf32>, vector<2x512xf32>, vector<4x512xf32> -> vector<4x512xf32>
    %35 = arith.addf %27, %34 : vector<4x512xf32>
    %c1_i32 = arith.constant 1 : i32
    %36 = tpu.dynamic_rotate %11 by %c1_i32 dim 1 : vector<2x512xf32>, i32 -> vector<2x512xf32>
    %37 = vector.extract_strided_slice %12 {offsets = [3, 0], sizes = [1, 512], strides = [1, 1]} : vector<9x512xf32> to vector<1x512xf32>
    %38 = vector.broadcast %37 : vector<1x512xf32> to vector<2x512xf32>
    %39 = arith.mulf %36, %38 : vector<2x512xf32>
    %c3 = arith.constant 3 : index
    %c0_18 = arith.constant 0 : index
    %c0_19 = arith.constant 0 : index
    %40 = vector.load %arg5[%c3, %c0_18, %c0_19] : memref<9x4x2xf32, #tpu.memory_space<vmem>>, vector<1x4x2xf32>
    %41 = vector.shape_cast %40 : vector<1x4x2xf32> to vector<4x2xf32>
    %cst_20 = arith.constant dense<0.000000e+00> : vector<4x512xf32>
    %42 = tpu.matmul %41, %39, %cst_20 {dimension_numbers = #tpu.dot_dimension_numbers<[1], [0], [0], [1], [0, 0, 1, 1], [], []>} : vector<4x2xf32>, vector<2x512xf32>, vector<4x512xf32> -> vector<4x512xf32>
    %43 = arith.addf %35, %42 : vector<4x512xf32>
    %44 = vector.extract_strided_slice %12 {offsets = [4, 0], sizes = [1, 512], strides = [1, 1]} : vector<9x512xf32> to vector<1x512xf32>
    %45 = vector.broadcast %44 : vector<1x512xf32> to vector<2x512xf32>
    %46 = arith.mulf %11, %45 : vector<2x512xf32>
    %c4 = arith.constant 4 : index
    %c0_21 = arith.constant 0 : index
    %c0_22 = arith.constant 0 : index
    %47 = vector.load %arg5[%c4, %c0_21, %c0_22] : memref<9x4x2xf32, #tpu.memory_space<vmem>>, vector<1x4x2xf32>
    %48 = vector.shape_cast %47 : vector<1x4x2xf32> to vector<4x2xf32>
    %cst_23 = arith.constant dense<0.000000e+00> : vector<4x512xf32>
    %49 = tpu.matmul %48, %46, %cst_23 {dimension_numbers = #tpu.dot_dimension_numbers<[1], [0], [0], [1], [0, 0, 1, 1], [], []>} : vector<4x2xf32>, vector<2x512xf32>, vector<4x512xf32> -> vector<4x512xf32>
    %50 = arith.addf %43, %49 : vector<4x512xf32>
    %c511_i32 = arith.constant 511 : i32
    %51 = tpu.dynamic_rotate %11 by %c511_i32 dim 1 : vector<2x512xf32>, i32 -> vector<2x512xf32>
    %52 = vector.extract_strided_slice %12 {offsets = [5, 0], sizes = [1, 512], strides = [1, 1]} : vector<9x512xf32> to vector<1x512xf32>
    %53 = vector.broadcast %52 : vector<1x512xf32> to vector<2x512xf32>
    %54 = arith.mulf %51, %53 : vector<2x512xf32>
    %c5 = arith.constant 5 : index
    %c0_24 = arith.constant 0 : index
    %c0_25 = arith.constant 0 : index
    %55 = vector.load %arg5[%c5, %c0_24, %c0_25] : memref<9x4x2xf32, #tpu.memory_space<vmem>>, vector<1x4x2xf32>
    %56 = vector.shape_cast %55 : vector<1x4x2xf32> to vector<4x2xf32>
    %cst_26 = arith.constant dense<0.000000e+00> : vector<4x512xf32>
    %57 = tpu.matmul %56, %54, %cst_26 {dimension_numbers = #tpu.dot_dimension_numbers<[1], [0], [0], [1], [0, 0, 1, 1], [], []>} : vector<4x2xf32>, vector<2x512xf32>, vector<4x512xf32> -> vector<4x512xf32>
    %58 = arith.addf %50, %57 : vector<4x512xf32>
    %c497_i32 = arith.constant 497 : i32
    %59 = tpu.dynamic_rotate %11 by %c497_i32 dim 1 : vector<2x512xf32>, i32 -> vector<2x512xf32>
    %60 = vector.extract_strided_slice %12 {offsets = [6, 0], sizes = [1, 512], strides = [1, 1]} : vector<9x512xf32> to vector<1x512xf32>
    %61 = vector.broadcast %60 : vector<1x512xf32> to vector<2x512xf32>
    %62 = arith.mulf %59, %61 : vector<2x512xf32>
    %c6 = arith.constant 6 : index
    %c0_27 = arith.constant 0 : index
    %c0_28 = arith.constant 0 : index
    %63 = vector.load %arg5[%c6, %c0_27, %c0_28] : memref<9x4x2xf32, #tpu.memory_space<vmem>>, vector<1x4x2xf32>
    %64 = vector.shape_cast %63 : vector<1x4x2xf32> to vector<4x2xf32>
    %cst_29 = arith.constant dense<0.000000e+00> : vector<4x512xf32>
    %65 = tpu.matmul %64, %62, %cst_29 {dimension_numbers = #tpu.dot_dimension_numbers<[1], [0], [0], [1], [0, 0, 1, 1], [], []>} : vector<4x2xf32>, vector<2x512xf32>, vector<4x512xf32> -> vector<4x512xf32>
    %66 = arith.addf %58, %65 : vector<4x512xf32>
    %c496_i32 = arith.constant 496 : i32
    %67 = tpu.dynamic_rotate %11 by %c496_i32 dim 1 : vector<2x512xf32>, i32 -> vector<2x512xf32>
    %68 = vector.extract_strided_slice %12 {offsets = [7, 0], sizes = [1, 512], strides = [1, 1]} : vector<9x512xf32> to vector<1x512xf32>
    %69 = vector.broadcast %68 : vector<1x512xf32> to vector<2x512xf32>
    %70 = arith.mulf %67, %69 : vector<2x512xf32>
    %c7 = arith.constant 7 : index
    %c0_30 = arith.constant 0 : index
    %c0_31 = arith.constant 0 : index
    %71 = vector.load %arg5[%c7, %c0_30, %c0_31] : memref<9x4x2xf32, #tpu.memory_space<vmem>>, vector<1x4x2xf32>
    %72 = vector.shape_cast %71 : vector<1x4x2xf32> to vector<4x2xf32>
    %cst_32 = arith.constant dense<0.000000e+00> : vector<4x512xf32>
    %73 = tpu.matmul %72, %70, %cst_32 {dimension_numbers = #tpu.dot_dimension_numbers<[1], [0], [0], [1], [0, 0, 1, 1], [], []>} : vector<4x2xf32>, vector<2x512xf32>, vector<4x512xf32> -> vector<4x512xf32>
    %74 = arith.addf %66, %73 : vector<4x512xf32>
    %c495_i32 = arith.constant 495 : i32
    %75 = tpu.dynamic_rotate %11 by %c495_i32 dim 1 : vector<2x512xf32>, i32 -> vector<2x512xf32>
    %76 = vector.extract_strided_slice %12 {offsets = [8, 0], sizes = [1, 512], strides = [1, 1]} : vector<9x512xf32> to vector<1x512xf32>
    %77 = vector.broadcast %76 : vector<1x512xf32> to vector<2x512xf32>
    %78 = arith.mulf %75, %77 : vector<2x512xf32>
    %c8 = arith.constant 8 : index
    %c0_33 = arith.constant 0 : index
    %c0_34 = arith.constant 0 : index
    %79 = vector.load %arg5[%c8, %c0_33, %c0_34] : memref<9x4x2xf32, #tpu.memory_space<vmem>>, vector<1x4x2xf32>
    %80 = vector.shape_cast %79 : vector<1x4x2xf32> to vector<4x2xf32>
    %cst_35 = arith.constant dense<0.000000e+00> : vector<4x512xf32>
    %81 = tpu.matmul %80, %78, %cst_35 {dimension_numbers = #tpu.dot_dimension_numbers<[1], [0], [0], [1], [0, 0, 1, 1], [], []>} : vector<4x2xf32>, vector<2x512xf32>, vector<4x512xf32> -> vector<4x512xf32>
    %82 = arith.addf %74, %81 : vector<4x512xf32>
    %c0_36 = arith.constant 0 : index
    %c0_37 = arith.constant 0 : index
    %83 = vector.load %arg6[%c0_36, %c0_37] : memref<4x1xf32, #tpu.memory_space<vmem>>, vector<4x1xf32>
    %84 = vector.broadcast %83 : vector<4x1xf32> to vector<4x512xf32>
    %85 = arith.addf %82, %84 : vector<4x512xf32>
    %86 = arith.negf %85 : vector<4x512xf32>
    %87 = math.exp %86 : vector<4x512xf32>
    %cst_38 = arith.constant 1.000000e+00 : f32
    %88 = vector.broadcast %cst_38 : f32 to vector<4x512xf32>
    %89 = arith.addf %88, %87 : vector<4x512xf32>
    %90 = arith.divf %88, %89 : vector<4x512xf32>
    %91 = arith.mulf %85, %90 : vector<4x512xf32>
    %92 = arith.addf %91, %0 : vector<4x512xf32>
    %c0_39 = arith.constant 0 : index
    %c0_40 = arith.constant 0 : index
    %93 = vector.load %arg7[%c0_39, %c0_40] : memref<4x512xf32, #tpu.memory_space<vmem>>, vector<4x512xf32>
    tpu.vector_store %arg7[%c0_39, %c0_40], %92 {strides = array<i32>} : memref<4x512xf32, #tpu.memory_space<vmem>>, vector<4x512xf32>,
    return
  }
  func.func @transform_0(%arg0: i32) -> (i32, i32) {
    %c0_i32 = arith.constant 0 : i32
    %c0_i32_0 = arith.constant 0 : i32
    return %c0_i32, %arg0 : i32, i32
  }
  func.func @transform_1(%arg0: i32) -> (i32, i32) {
    %c0_i32 = arith.constant 0 : i32
    %c0_i32_0 = arith.constant 0 : i32
    %c0_i32_1 = arith.constant 0 : i32
    return %c0_i32, %c0_i32_0 : i32, i32
  }
  func.func @transform_2(%arg0: i32) -> (i32, i32) {
    %c0_i32 = arith.constant 0 : i32
    %c0_i32_0 = arith.constant 0 : i32
    %c0_i32_1 = arith.constant 0 : i32
    return %c0_i32, %c0_i32_0 : i32, i32
  }
  func.func @transform_3(%arg0: i32) -> (i32, i32) {
    %c0_i32 = arith.constant 0 : i32
    %c0_i32_0 = arith.constant 0 : i32
    %c0_i32_1 = arith.constant 0 : i32
    return %c0_i32, %c0_i32_0 : i32, i32
  }
  func.func @transform_4(%arg0: i32) -> (i32, i32, i32) {
    %c0_i32 = arith.constant 0 : i32
    %c0_i32_0 = arith.constant 0 : i32
    %c0_i32_1 = arith.constant 0 : i32
    %c0_i32_2 = arith.constant 0 : i32
    return %c0_i32, %c0_i32_0, %c0_i32_1 : i32, i32, i32
  }
  func.func @transform_5(%arg0: i32) -> (i32, i32) {
    %c0_i32 = arith.constant 0 : i32
    %c0_i32_0 = arith.constant 0 : i32
    %c0_i32_1 = arith.constant 0 : i32
    return %c0_i32, %c0_i32_0 : i32, i32
  }
  func.func @transform_6(%arg0: i32) -> (i32, i32) {
    %c0_i32 = arith.constant 0 : i32
    %c0_i32_0 = arith.constant 0 : i32
    return %c0_i32, %arg0 : i32, i32
  }
}

</mosaic_0001>

<llo_original>
// kernel: tpu_custom_call.1
$region0: #{tpu_custom_call.1}
  #allocation0 [shape = 'u32[]', space=smem, size = 0x4, offset = 0x4, fixed_abs, tag = 'smem constant byte address 0x4 - core index']
  #allocation1 [shape = 'u32[144,128]{1,0:T(1,128)}', space=vmem, size = 0x12000, scoped, tag = 'internal scratch']
  %s0 = inlined_call_operand.vmem [shape: f32[4,512], index: 0, kind: input, shape index: {}]
  %s1 = inlined_call_operand.hbm [shape: f32[9,512], index: 1, kind: input, shape index: {}]
  %s2 = inlined_call_operand.vmem [shape: f32[2,4], index: 2, kind: input, shape index: {}]
  %s3 = inlined_call_operand.vmem [shape: f32[2,1], index: 3, kind: input, shape index: {}]
  %s4 = inlined_call_operand.vmem [shape: f32[9,4,2], index: 4, kind: input, shape index: {}]
  %s5 = inlined_call_operand.vmem [shape: f32[4,1], index: 5, kind: input, shape index: {}]
  %s6 = inlined_call_operand.hbm [shape: f32[4,512], index: 6, kind: output, shape index: {}]
  %s7 = sld [smem:[#allocation0]]
  $region38: #{tpu_custom_call.1} parent=0
    _
  %s9 = ssub.s32 1, %s7
  %s10 = scalar_select 0, %s9, %s7
  $region1: #{tpu_custom_call.1} parent=0
    #allocation2 [shape = 'u8[32768]{0}', space=vmem, size = 0x8000, scoped, tag = 'input window, operand 1, single buffered']
    #allocation3 [shape = 's32[1]{0}', space=sflag, size = 0x4, scoped, tag = 'scoped memory for tpu_custom_call.1']
    #allocation4 [shape = 's32[1]{0}', space=sflag, size = 0x4, scoped, tag = 'scoped memory for tpu_custom_call.1']
    #allocation5 [shape = 'u8[8192]{0}', space=vmem, size = 0x2000, scoped, tag = 'output window, operand 0, single buffered']
    %11 = vsyncpa [#allocation3], 0
    %12 = vsyncpa [#allocation4], 0
    // Predicated region
    $region2: #{tpu_custom_call.1} parent=1 // pred_check
      _
    $region3: #{tpu_custom_call.1} parent=1 // pred_check_branch
      %14 = sbr.rel (0) target = $region5
    $region4: #{tpu_custom_call.1} parent=1 // pred_region
      _
    $region5: #{tpu_custom_call.1} parent=1 // pred_fallthru
      _
    // Predicated region
    $region6: #{tpu_custom_call.1} parent=1 // pred_check
      _
    $region7: #{tpu_custom_call.1} parent=1 // pred_check_branch
      %16 = sbr.rel (0) target = $region9
    $region8: #{tpu_custom_call.1} parent=1 // pred_region
      %s18 = ssub.s32 1024, 1024
      %19 = vsyncadd [#allocation3], %s18
      %s20 = sshll.u32 [#allocation2], 4
      %s21 = int_to_ptr.vmem [resolvable:$true] %s20
      %26 = dma.hbm_to_vmem [thread:$0]  %s1, 1024, %s21, [#allocation3], 512, 512, 32
    $region9: #{tpu_custom_call.1} parent=1 // pred_fallthru
      _
    // Predicated region
    $region10: #{tpu_custom_call.1} parent=1 // pred_check
      _
    $region11: #{tpu_custom_call.1} parent=1 // pred_check_branch
      %28 = sbr.rel (0) target = $region13
    $region12: #{tpu_custom_call.1} parent=1 // pred_region
      _
    $region13: #{tpu_custom_call.1} parent=1 // pred_fallthru
      _
    // Predicated region
    $region14: #{tpu_custom_call.1} parent=1 // pred_check
      _
    $region15: #{tpu_custom_call.1} parent=1 // pred_check_branch
      %30 = sbr.rel (0) target = $region17
    $region16: #{tpu_custom_call.1} parent=1 // pred_region
      _
    $region17: #{tpu_custom_call.1} parent=1 // pred_fallthru
      _
    // Predicated region
    $region18: #{tpu_custom_call.1} parent=1 // pred_check
      _
    $region19: #{tpu_custom_call.1} parent=1 // pred_check_branch
      %32 = sbr.rel (0) target = $region21
    $region20: #{tpu_custom_call.1} parent=1 // pred_region
      _
    $region21: #{tpu_custom_call.1} parent=1 // pred_fallthru
      _
    // Predicated region
    $region22: #{tpu_custom_call.1} parent=1 // pred_check
      _
    $region23: #{tpu_custom_call.1} parent=1 // pred_check_branch
      %34 = sbr.rel (0) target = $region25
    $region24: #{tpu_custom_call.1} parent=1 // pred_region
      _
    $region25: #{tpu_custom_call.1} parent=1 // pred_fallthru
      _
    // Predicated region
    $region26: #{tpu_custom_call.1} parent=1 // pred_check
      _
    $region27: #{tpu_custom_call.1} parent=1 // pred_check_branch
      %36 = sbr.rel (0) target = $region29
    $region28: #{tpu_custom_call.1} parent=1 // pred_region
      %37 = dma.done [#allocation3], 1024
    $region29: #{tpu_custom_call.1} parent=1 // pred_fallthru
      _
    %v38 = vld [vmem:[%s0] sm:$0xff]
    %v39 = vld [vmem:[%s0 + $0x8] sm:$0xff]
    %v40 = vld [vmem:[%s2] sm:$0x3]
    %v41 = vld [vmem:[%s3] sm:$0x3]
    %43 = vset.pattern.permute.xlu0 0
    %44 = vperm.xlu0 %43, %v41
    %v45 = vpop.permute.xlu0 %44
    %v49 = vcombine.high %v38, %v38
    %v50 = vcombine.high %v39, %v39
    %vm51 = vcmask 31744
    %v53 = vsel %vm51, %v40, 0
    %vm55 = vcmask 1043456
    %v56 = vsel %vm55, %v38, 0
    %v58 = vsel %vm55, %v49, 0
    %v60 = vsel %vm55, %v39, 0
    %v62 = vsel %vm55, %v50, 0
    %64 = vmatprep.subr.mxu0 %v58
    %65 = vmatpush1.msra.mxu0 %v56
    %66 = vmatprep.subr.mxu0 0.0
    %67 = vmatpush1.msra.mxu0 0.0
    %68 = vmatprep.subr.mxu0 0.0
    %69 = vmatpush1.msra.mxu0 0.0
    %70 = vmatprep.subr.mxu0 0.0
    %71 = vmatpush1.msra.mxu0 0.0
    %72 = vmatprep.subr.mxu0 0.0
    %73 = vmatpush1.msra.mxu0 0.0
    %74 = vmatprep.subr.mxu0 0.0
    %75 = vmatpush1.msra.mxu0 0.0
    %76 = vmatprep.subr.mxu0 0.0
    %77 = vmatpush1.msra.mxu0 0.0
    %78 = vmatprep.subr.mxu0 0.0
    %79 = vmatpush1.msra.mxu0 0.0
    %80 = vmatprep.subr.mxu0 0.0
    %81 = vmatpush1.msra.mxu0 0.0
    %82 = vmatprep.subr.mxu0 0.0
    %83 = vmatpush1.msra.mxu0 0.0
    %84 = vmatprep.subr.mxu0 0.0
    %85 = vmatpush1.msra.mxu0 0.0
    %86 = vmatprep.subr.mxu0 0.0
    %87 = vmatpush1.msra.mxu0 0.0
    %88 = vmatprep.subr.mxu0 0.0
    %89 = vmatpush1.msra.mxu0 0.0
    %90 = vmatprep.subr.mxu0 0.0
    %91 = vmatpush1.msra.mxu0 0.0
    %92 = vmatprep.subr.mxu0 0.0
    %93 = vmatpush1.msra.mxu0 0.0
    %94 = vmatprep.subr.mxu0 0.0
    %95 = vmatpush1.msra.mxu0 0.0
    %96 = vmatprep.subr.mxu0 0.0
    %97 = vmatpush1.msra.mxu0 0.0
    %98 = vmatprep.subr.mxu0 0.0
    %99 = vmatpush1.msra.mxu0 0.0
    %100 = vmatprep.subr.mxu0 0.0
    %101 = vmatpush1.msra.mxu0 0.0
    %102 = vmatprep.subr.mxu0 0.0
    %103 = vmatpush1.msra.mxu0 0.0
    %104 = vmatprep.subr.mxu0 0.0
    %105 = vmatpush1.msra.mxu0 0.0
    %106 = vmatprep.subr.mxu0 0.0
    %107 = vmatpush1.msra.mxu0 0.0
    %108 = vmatprep.subr.mxu0 0.0
    %109 = vmatpush1.msra.mxu0 0.0
    %110 = vmatprep.subr.mxu0 0.0
    %111 = vmatpush1.msra.mxu0 0.0
    %112 = vmatprep.subr.mxu0 0.0
    %113 = vmatpush1.msra.mxu0 0.0
    %114 = vmatprep.subr.mxu0 0.0
    %115 = vmatpush1.msra.mxu0 0.0
    %116 = vmatprep.subr.mxu0 0.0
    %117 = vmatpush1.msra.mxu0 0.0
    %118 = vmatprep.subr.mxu0 0.0
    %119 = vmatpush1.msra.mxu0 0.0
    %120 = vmatprep.subr.mxu0 0.0
    %121 = vmatpush1.msra.mxu0 0.0
    %122 = vmatprep.subr.mxu0 0.0
    %123 = vmatpush1.msra.mxu0 0.0
    %124 = vmatprep.subr.mxu0 0.0
    %125 = vmatpush1.msra.mxu0 0.0
    %126 = vmatprep.subr.mxu0 0.0
    %127 = vmatpush1.msra.mxu0 0.0
    %128 = vmatprep.mubr.f32.mxu0 0.0
    %129 = vmatmul.mubr.f32.gmra.mrb[0].mxu0 %v53
    %v130 = vpop.f32.mrb[0].mxu0
    %v131 = vadd.f32 %v45, %v130
    %v132 = vpop.f32.mrb[0].mxu0
    %v133 = vadd.f32 %v45, %v132
    %134 = vdwg.mxu0
    %135 = vmatprep.subr.mxu0 %v62
    %136 = vmatpush1.msra.mxu0 %v60
    %137 = vmatprep.subr.mxu0 0.0
    %138 = vmatpush1.msra.mxu0 0.0
    %139 = vmatprep.subr.mxu0 0.0
    %140 = vmatpush1.msra.mxu0 0.0
    %141 = vmatprep.subr.mxu0 0.0
    %142 = vmatpush1.msra.mxu0 0.0
    %143 = vmatprep.subr.mxu0 0.0
    %144 = vmatpush1.msra.mxu0 0.0
    %145 = vmatprep.subr.mxu0 0.0
    %146 = vmatpush1.msra.mxu0 0.0
    %147 = vmatprep.subr.mxu0 0.0
    %148 = vmatpush1.msra.mxu0 0.0
    %149 = vmatprep.subr.mxu0 0.0
    %150 = vmatpush1.msra.mxu0 0.0
    %151 = vmatprep.subr.mxu0 0.0
    %152 = vmatpush1.msra.mxu0 0.0
    %153 = vmatprep.subr.mxu0 0.0
    %154 = vmatpush1.msra.mxu0 0.0
    %155 = vmatprep.subr.mxu0 0.0
    %156 = vmatpush1.msra.mxu0 0.0
    %157 = vmatprep.subr.mxu0 0.0
    %158 = vmatpush1.msra.mxu0 0.0
    %159 = vmatprep.subr.mxu0 0.0
    %160 = vmatpush1.msra.mxu0 0.0
    %161 = vmatprep.subr.mxu0 0.0
    %162 = vmatpush1.msra.mxu0 0.0
    %163 = vmatprep.subr.mxu0 0.0
    %164 = vmatpush1.msra.mxu0 0.0
    %165 = vmatprep.subr.mxu0 0.0
    %166 = vmatpush1.msra.mxu0 0.0
    %167 = vmatprep.subr.mxu0 0.0
    %168 = vmatpush1.msra.mxu0 0.0
    %169 = vmatprep.subr.mxu0 0.0
    %170 = vmatpush1.msra.mxu0 0.0
    %171 = vmatprep.subr.mxu0 0.0
    %172 = vmatpush1.msra.mxu0 0.0
    %173 = vmatprep.subr.mxu0 0.0
    %174 = vmatpush1.msra.mxu0 0.0
    %175 = vmatprep.subr.mxu0 0.0
    %176 = vmatpush1.msra.mxu0 0.0
    %177 = vmatprep.subr.mxu0 0.0
    %178 = vmatpush1.msra.mxu0 0.0
    %179 = vmatprep.subr.mxu0 0.0
    %180 = vmatpush1.msra.mxu0 0.0
    %181 = vmatprep.subr.mxu0 0.0
    %182 = vmatpush1.msra.mxu0 0.0
    %183 = vmatprep.subr.mxu0 0.0
    %184 = vmatpush1.msra.mxu0 0.0
    %185 = vmatprep.subr.mxu0 0.0
    %186 = vmatpush1.msra.mxu0 0.0
    %187 = vmatprep.subr.mxu0 0.0
    %188 = vmatpush1.msra.mxu0 0.0
    %189 = vmatprep.subr.mxu0 0.0
    %190 = vmatpush1.msra.mxu0 0.0
    %191 = vmatprep.subr.mxu0 0.0
    %192 = vmatpush1.msra.mxu0 0.0
    %193 = vmatprep.subr.mxu0 0.0
    %194 = vmatpush1.msra.mxu0 0.0
    %195 = vmatprep.subr.mxu0 0.0
    %196 = vmatpush1.msra.mxu0 0.0
    %197 = vmatprep.subr.mxu0 0.0
    %198 = vmatpush1.msra.mxu0 0.0
    %199 = vmatprep.mubr.f32.mxu0 0.0
    %200 = vmatmul.mubr.f32.gmra.mrb[0].mxu0 %v53
    %v201 = vpop.f32.mrb[0].mxu0
    %v202 = vadd.f32 %v45, %v201
    %v203 = vpop.f32.mrb[0].mxu0
    %v204 = vadd.f32 %v45, %v203
    %205 = vdwg.mxu0
    %v206 = vxor.u32 %v131, 2147483648
    %v207 = vxor.u32 %v133, 2147483648
    %v208 = vxor.u32 %v202, 2147483648
    %v209 = vxor.u32 %v204, 2147483648
    %v210 = vmul.f32 %v206, 1.442695
    %v211 = vpow.pop %v210
    %v212 = vmul.f32 %v207, 1.442695
    %v213 = vpow.pop %v212
    %v214 = vmul.f32 %v208, 1.442695
    %v215 = vpow.pop %v214
    %v216 = vmul.f32 %v209, 1.442695
    %v217 = vpow.pop %v216
    %v218 = vadd.f32 %v211, 1.0
    %v219 = vadd.f32 %v213, 1.0
    %v220 = vadd.f32 %v215, 1.0
    %v221 = vadd.f32 %v217, 1.0
    %v222 = vrcp.pop %v218
    %v223 = vmul.f32 1.0, %v222
    %v224 = vrcp.pop %v219
    %v225 = vmul.f32 1.0, %v224
    %v226 = vrcp.pop %v220
    %v227 = vmul.f32 1.0, %v226
    %v228 = vrcp.pop %v221
    %v229 = vmul.f32 1.0, %v228
    %v230 = vmul.f32 %v131, %v223
    %v231 = vmul.f32 %v133, %v225
    %v232 = vmul.f32 %v202, %v227
    %v233 = vmul.f32 %v204, %v229
    %v234 = vld [vmem:[#allocation2] sm:$0xff]
    %v235 = vld [vmem:[#allocation2 + $0x8] sm:$0xff]
    %v236 = vld [vmem:[#allocation2 + $0x10] sm:$0xff]
    %v237 = vld [vmem:[#allocation2 + $0x18] sm:$0xff]
    %v238 = vld [vmem:[#allocation2 + $0x20] sm:$0x1]
    %v239 = vld [vmem:[#allocation2 + $0x28] sm:$0x1]
    %v240 = vld [vmem:[#allocation2 + $0x30] sm:$0x1]
    %v241 = vld [vmem:[#allocation2 + $0x38] sm:$0x1]
    %242 = vrot.lane.b32.xlu0 %v230, 17
    %v243 = vpop.permute.xlu0 %242
    %244 = vrot.lane.b32.xlu0 %v231, 17
    %v245 = vpop.permute.xlu0 %244
    %246 = vrot.lane.b32.xlu0 %v232, 17
    %v247 = vpop.permute.xlu0 %246
    %248 = vrot.lane.b32.xlu0 %v233, 17
    %v249 = vpop.permute.xlu0 %248
    %v250 = vlaneseq
    %v251 = vand.u32 %v250, 127
    %vm252 = vcmp.lt.s32.totalorder %v251, 17
    %v253 = vsel %vm252, %v247, %v249
    %v254 = vsel %vm252, %v245, %v247
    %v255 = vsel %vm252, %v243, %v245
    %v256 = vsel %vm252, %v249, %v243
    %v257 = vlaneseq
    %v258 = vshrl.u32 %v257, 7
    %v259 = vsub.s32 0, %v258
    %v260 = vrot.slane %v234, %v259
    %v261 = vlaneseq
    %v262 = vshrl.u32 %v261, 7
    %v263 = vsub.s32 0, %v262
    %v264 = vrot.slane %v235, %v263
    %v265 = vlaneseq
    %v266 = vshrl.u32 %v265, 7
    %v267 = vsub.s32 0, %v266
    %v268 = vrot.slane %v236, %v267
    %v269 = vlaneseq
    %v270 = vshrl.u32 %v269, 7
    %v271 = vsub.s32 0, %v270
    %v272 = vrot.slane %v237, %v271
    %v273 = vmul.f32 %v256, %v260
    %v274 = vmul.f32 %v255, %v264
    %v275 = vmul.f32 %v254, %v268
    %v276 = vmul.f32 %v253, %v272
    %v277 = vld [vmem:[%s4] sm:$0xf]
    %278 = vrot.lane.b32.xlu0 %v230, 16
    %v279 = vpop.permute.xlu0 %278
    %280 = vrot.lane.b32.xlu0 %v231, 16
    %v281 = vpop.permute.xlu0 %280
    %282 = vrot.lane.b32.xlu0 %v232, 16
    %v283 = vpop.permute.xlu0 %282
    %284 = vrot.lane.b32.xlu0 %v233, 16
    %v285 = vpop.permute.xlu0 %284
    %vm286 = vcmp.lt.s32.totalorder %v251, 16
    %v287 = vsel %vm286, %v283, %v285
    %v288 = vsel %vm286, %v281, %v283
    %v289 = vsel %vm286, %v279, %v281
    %v290 = vsel %vm286, %v285, %v279
    %v291 = vlaneseq
    %v292 = vshrl.u32 %v291, 7
    %v293 = vsub.s32 1, %v292
    %v294 = vrot.slane %v234, %v293
    %v295 = vlaneseq
    %v296 = vshrl.u32 %v295, 7
    %v297 = vsub.s32 1, %v296
    %v298 = vrot.slane %v235, %v297
    %v299 = vlaneseq
    %v300 = vshrl.u32 %v299, 7
    %v301 = vsub.s32 1, %v300
    %v302 = vrot.slane %v236, %v301
    %v303 = vlaneseq
    %v304 = vshrl.u32 %v303, 7
    %v305 = vsub.s32 1, %v304
    %v306 = vrot.slane %v237, %v305
    %v307 = vmul.f32 %v290, %v294
    %v308 = vmul.f32 %v289, %v298
    %v309 = vmul.f32 %v288, %v302
    %v310 = vmul.f32 %v287, %v306
    %s311 = scalar_lea.vmem %s4, 4
    %v312 = vld [vmem:[%s311] sm:$0xf]
    %vm313 = vcmask 15360
    %v315 = vsel %vm313, %v312, 0
    %vm317 = vcmask 1041408
    %v319 = vsel %vm317, %v307, 0
    %v322 = vsel %vm317, %v308, 0
    %v325 = vsel %vm317, %v309, 0
    %v328 = vsel %vm317, %v310, 0
    %330 = vmatprep.subr.mxu0 %v322
    %331 = vmatpush1.msra.mxu0 %v319
    %332 = vmatprep.subr.mxu0 0.0
    %333 = vmatpush1.msra.mxu0 0.0
    %334 = vmatprep.subr.mxu0 0.0
    %335 = vmatpush1.msra.mxu0 0.0
    %336 = vmatprep.subr.mxu0 0.0
    %337 = vmatpush1.msra.mxu0 0.0
    %338 = vmatprep.subr.mxu0 0.0
    %339 = vmatpush1.msra.mxu0 0.0
    %340 = vmatprep.subr.mxu0 0.0
    %341 = vmatpush1.msra.mxu0 0.0
    %342 = vmatprep.subr.mxu0 0.0
    %343 = vmatpush1.msra.mxu0 0.0
    %344 = vmatprep.subr.mxu0 0.0
    %345 = vmatpush1.msra.mxu0 0.0
    %346 = vmatprep.subr.mxu0 0.0
    %347 = vmatpush1.msra.mxu0 0.0
    %348 = vmatprep.subr.mxu0 0.0
    %349 = vmatpush1.msra.mxu0 0.0
    %350 = vmatprep.subr.mxu0 0.0
    %351 = vmatpush1.msra.mxu0 0.0
    %352 = vmatprep.subr.mxu0 0.0
    %353 = vmatpush1.msra.mxu0 0.0
    %354 = vmatprep.subr.mxu0 0.0
    %355 = vmatpush1.msra.mxu0 0.0
    %356 = vmatprep.subr.mxu0 0.0
    %357 = vmatpush1.msra.mxu0 0.0
    %358 = vmatprep.subr.mxu0 0.0
    %359 = vmatpush1.msra.mxu0 0.0
    %360 = vmatprep.subr.mxu0 0.0
    %361 = vmatpush1.msra.mxu0 0.0
    %362 = vmatprep.subr.mxu0 0.0
    %363 = vmatpush1.msra.mxu0 0.0
    %364 = vmatprep.subr.mxu0 0.0
    %365 = vmatpush1.msra.mxu0 0.0
    %366 = vmatprep.subr.mxu0 0.0
    %367 = vmatpush1.msra.mxu0 0.0
    %368 = vmatprep.subr.mxu0 0.0
    %369 = vmatpush1.msra.mxu0 0.0
    %370 = vmatprep.subr.mxu0 0.0
    %371 = vmatpush1.msra.mxu0 0.0
    %372 = vmatprep.subr.mxu0 0.0
    %373 = vmatpush1.msra.mxu0 0.0
    %374 = vmatprep.subr.mxu0 0.0
    %375 = vmatpush1.msra.mxu0 0.0
    %376 = vmatprep.subr.mxu0 0.0
    %377 = vmatpush1.msra.mxu0 0.0
    %378 = vmatprep.subr.mxu0 0.0
    %379 = vmatpush1.msra.mxu0 0.0
    %380 = vmatprep.subr.mxu0 0.0
    %381 = vmatpush1.msra.mxu0 0.0
    %382 = vmatprep.subr.mxu0 0.0
    %383 = vmatpush1.msra.mxu0 0.0
    %384 = vmatprep.subr.mxu0 0.0
    %385 = vmatpush1.msra.mxu0 0.0
    %386 = vmatprep.subr.mxu0 0.0
    %387 = vmatpush1.msra.mxu0 0.0
    %388 = vmatprep.subr.mxu0 0.0
    %389 = vmatpush1.msra.mxu0 0.0
    %390 = vmatprep.subr.mxu0 0.0
    %391 = vmatpush1.msra.mxu0 0.0
    %392 = vmatprep.subr.mxu0 0.0
    %393 = vmatpush1.msra.mxu0 0.0
    %394 = vmatprep.mubr.f32.mxu0 0.0
    %395 = vmatmul.mubr.f32.gmra.mrb[0].mxu0 %v315
    %v396 = vpop.f32.mrb[0].mxu0
    %v397 = vadd.f32 0.0, %v396
    %v398 = vpop.f32.mrb[0].mxu0
    %v399 = vadd.f32 0.0, %v398
    %400 = vdwg.mxu0
    %401 = vmatprep.subr.mxu0 %v328
    %402 = vmatpush1.msra.mxu0 %v325
    %403 = vmatprep.subr.mxu0 0.0
    %404 = vmatpush1.msra.mxu0 0.0
    %405 = vmatprep.subr.mxu0 0.0
    %406 = vmatpush1.msra.mxu0 0.0
    %407 = vmatprep.subr.mxu0 0.0
    %408 = vmatpush1.msra.mxu0 0.0
    %409 = vmatprep.subr.mxu0 0.0
    %410 = vmatpush1.msra.mxu0 0.0
    %411 = vmatprep.subr.mxu0 0.0
    %412 = vmatpush1.msra.mxu0 0.0
    %413 = vmatprep.subr.mxu0 0.0
    %414 = vmatpush1.msra.mxu0 0.0
    %415 = vmatprep.subr.mxu0 0.0
    %416 = vmatpush1.msra.mxu0 0.0
    %417 = vmatprep.subr.mxu0 0.0
    %418 = vmatpush1.msra.mxu0 0.0
    %419 = vmatprep.subr.mxu0 0.0
    %420 = vmatpush1.msra.mxu0 0.0
    %421 = vmatprep.subr.mxu0 0.0
    %422 = vmatpush1.msra.mxu0 0.0
    %423 = vmatprep.subr.mxu0 0.0
    %424 = vmatpush1.msra.mxu0 0.0
    %425 = vmatprep.subr.mxu0 0.0
    %426 = vmatpush1.msra.mxu0 0.0
    %427 = vmatprep.subr.mxu0 0.0
    %428 = vmatpush1.msra.mxu0 0.0
    %429 = vmatprep.subr.mxu0 0.0
    %430 = vmatpush1.msra.mxu0 0.0
    %431 = vmatprep.subr.mxu0 0.0
    %432 = vmatpush1.msra.mxu0 0.0
    %433 = vmatprep.subr.mxu0 0.0
    %434 = vmatpush1.msra.mxu0 0.0
    %435 = vmatprep.subr.mxu0 0.0
    %436 = vmatpush1.msra.mxu0 0.0
    %437 = vmatprep.subr.mxu0 0.0
    %438 = vmatpush1.msra.mxu0 0.0
    %439 = vmatprep.subr.mxu0 0.0
    %440 = vmatpush1.msra.mxu0 0.0
    %441 = vmatprep.subr.mxu0 0.0
    %442 = vmatpush1.msra.mxu0 0.0
    %443 = vmatprep.subr.mxu0 0.0
    %444 = vmatpush1.msra.mxu0 0.0
    %445 = vmatprep.subr.mxu0 0.0
    %446 = vmatpush1.msra.mxu0 0.0
    %447 = vmatprep.subr.mxu0 0.0
    %448 = vmatpush1.msra.mxu0 0.0
    %449 = vmatprep.subr.mxu0 0.0
    %450 = vmatpush1.msra.mxu0 0.0
    %451 = vmatprep.subr.mxu0 0.0
    %452 = vmatpush1.msra.mxu0 0.0
    %453 = vmatprep.subr.mxu0 0.0
    %454 = vmatpush1.msra.mxu0 0.0
    %455 = vmatprep.subr.mxu0 0.0
    %456 = vmatpush1.msra.mxu0 0.0
    %457 = vmatprep.subr.mxu0 0.0
    %458 = vmatpush1.msra.mxu0 0.0
    %459 = vmatprep.subr.mxu0 0.0
    %460 = vmatpush1.msra.mxu0 0.0
    %461 = vmatprep.subr.mxu0 0.0
    %462 = vmatpush1.msra.mxu0 0.0
    %463 = vmatprep.subr.mxu0 0.0
    %464 = vmatpush1.msra.mxu0 0.0
    %465 = vmatprep.mubr.f32.mxu0 0.0
    %466 = vmatmul.mubr.f32.gmra.mrb[0].mxu0 %v315
    %v467 = vpop.f32.mrb[0].mxu0
    %v468 = vadd.f32 0.0, %v467
    %v469 = vpop.f32.mrb[0].mxu0
    %v470 = vadd.f32 0.0, %v469
    %471 = vdwg.mxu0
    %v473 = vsel %vm313, %v277, 0
    %v476 = vsel %vm317, %v273, 0
    %v479 = vsel %vm317, %v274, 0
    %v482 = vsel %vm317, %v275, 0
    %v485 = vsel %vm317, %v276, 0
    %487 = vmatprep.subr.mxu0 %v479
    %488 = vmatpush1.msra.mxu0 %v476
    %489 = vmatprep.subr.mxu0 0.0
    %490 = vmatpush1.msra.mxu0 0.0
    %491 = vmatprep.subr.mxu0 0.0
    %492 = vmatpush1.msra.mxu0 0.0
    %493 = vmatprep.subr.mxu0 0.0
    %494 = vmatpush1.msra.mxu0 0.0
    %495 = vmatprep.subr.mxu0 0.0
    %496 = vmatpush1.msra.mxu0 0.0
    %497 = vmatprep.subr.mxu0 0.0
    %498 = vmatpush1.msra.mxu0 0.0
    %499 = vmatprep.subr.mxu0 0.0
    %500 = vmatpush1.msra.mxu0 0.0
    %501 = vmatprep.subr.mxu0 0.0
    %502 = vmatpush1.msra.mxu0 0.0
    %503 = vmatprep.subr.mxu0 0.0
    %504 = vmatpush1.msra.mxu0 0.0
    %505 = vmatprep.subr.mxu0 0.0
    %506 = vmatpush1.msra.mxu0 0.0
    %507 = vmatprep.subr.mxu0 0.0
    %508 = vmatpush1.msra.mxu0 0.0
    %509 = vmatprep.subr.mxu0 0.0
    %510 = vmatpush1.msra.mxu0 0.0
    %511 = vmatprep.subr.mxu0 0.0
    %512 = vmatpush1.msra.mxu0 0.0
    %513 = vmatprep.subr.mxu0 0.0
    %514 = vmatpush1.msra.mxu0 0.0
    %515 = vmatprep.subr.mxu0 0.0
    %516 = vmatpush1.msra.mxu0 0.0
    %517 = vmatprep.subr.mxu0 0.0
    %518 = vmatpush1.msra.mxu0 0.0
    %519 = vmatprep.subr.mxu0 0.0
    %520 = vmatpush1.msra.mxu0 0.0
    %521 = vmatprep.subr.mxu0 0.0
    %522 = vmatpush1.msra.mxu0 0.0
    %523 = vmatprep.subr.mxu0 0.0
    %524 = vmatpush1.msra.mxu0 0.0
    %525 = vmatprep.subr.mxu0 0.0
    %526 = vmatpush1.msra.mxu0 0.0
    %527 = vmatprep.subr.mxu0 0.0
    %528 = vmatpush1.msra.mxu0 0.0
    %529 = vmatprep.subr.mxu0 0.0
    %530 = vmatpush1.msra.mxu0 0.0
    %531 = vmatprep.subr.mxu0 0.0
    %532 = vmatpush1.msra.mxu0 0.0
    %533 = vmatprep.subr.mxu0 0.0
    %534 = vmatpush1.msra.mxu0 0.0
    %535 = vmatprep.subr.mxu0 0.0
    %536 = vmatpush1.msra.mxu0 0.0
    %537 = vmatprep.subr.mxu0 0.0
    %538 = vmatpush1.msra.mxu0 0.0
    %539 = vmatprep.subr.mxu0 0.0
    %540 = vmatpush1.msra.mxu0 0.0
    %541 = vmatprep.subr.mxu0 0.0
    %542 = vmatpush1.msra.mxu0 0.0
    %543 = vmatprep.subr.mxu0 0.0
    %544 = vmatpush1.msra.mxu0 0.0
    %545 = vmatprep.subr.mxu0 0.0
    %546 = vmatpush1.msra.mxu0 0.0
    %547 = vmatprep.subr.mxu0 0.0
    %548 = vmatpush1.msra.mxu0 0.0
    %549 = vmatprep.subr.mxu0 0.0
    %550 = vmatpush1.msra.mxu0 0.0
    %551 = vmatprep.mubr.f32.mxu0 0.0
    %552 = vmatmul.mubr.f32.gmra.mrb[0].mxu0 %v473
    %v553 = vpop.f32.mrb[0].mxu0
    %v554 = vadd.f32 %v397, %v553
    %v555 = vpop.f32.mrb[0].mxu0
    %v556 = vadd.f32 %v399, %v555
    %557 = vdwg.mxu0
    %558 = vmatprep.subr.mxu0 %v485
    %559 = vmatpush1.msra.mxu0 %v482
    %560 = vmatprep.subr.mxu0 0.0
    %561 = vmatpush1.msra.mxu0 0.0
    %562 = vmatprep.subr.mxu0 0.0
    %563 = vmatpush1.msra.mxu0 0.0
    %564 = vmatprep.subr.mxu0 0.0
    %565 = vmatpush1.msra.mxu0 0.0
    %566 = vmatprep.subr.mxu0 0.0
    %567 = vmatpush1.msra.mxu0 0.0
    %568 = vmatprep.subr.mxu0 0.0
    %569 = vmatpush1.msra.mxu0 0.0
    %570 = vmatprep.subr.mxu0 0.0
    %571 = vmatpush1.msra.mxu0 0.0
    %572 = vmatprep.subr.mxu0 0.0
    %573 = vmatpush1.msra.mxu0 0.0
    %574 = vmatprep.subr.mxu0 0.0
    %575 = vmatpush1.msra.mxu0 0.0
    %576 = vmatprep.subr.mxu0 0.0
    %577 = vmatpush1.msra.mxu0 0.0
    %578 = vmatprep.subr.mxu0 0.0
    %579 = vmatpush1.msra.mxu0 0.0
    %580 = vmatprep.subr.mxu0 0.0
    %581 = vmatpush1.msra.mxu0 0.0
    %582 = vmatprep.subr.mxu0 0.0
    %583 = vmatpush1.msra.mxu0 0.0
    %584 = vmatprep.subr.mxu0 0.0
    %585 = vmatpush1.msra.mxu0 0.0
    %586 = vmatprep.subr.mxu0 0.0
    %587 = vmatpush1.msra.mxu0 0.0
    %588 = vmatprep.subr.mxu0 0.0
    %589 = vmatpush1.msra.mxu0 0.0
    %590 = vmatprep.subr.mxu0 0.0
    %591 = vmatpush1.msra.mxu0 0.0
    %592 = vmatprep.subr.mxu0 0.0
    %593 = vmatpush1.msra.mxu0 0.0
    %594 = vmatprep.subr.mxu0 0.0
    %595 = vmatpush1.msra.mxu0 0.0
    %596 = vmatprep.subr.mxu0 0.0
    %597 = vmatpush1.msra.mxu0 0.0
    %598 = vmatprep.subr.mxu0 0.0
    %599 = vmatpush1.msra.mxu0 0.0
    %600 = vmatprep.subr.mxu0 0.0
    %601 = vmatpush1.msra.mxu0 0.0
    %602 = vmatprep.subr.mxu0 0.0
    %603 = vmatpush1.msra.mxu0 0.0
    %604 = vmatprep.subr.mxu0 0.0
    %605 = vmatpush1.msra.mxu0 0.0
    %606 = vmatprep.subr.mxu0 0.0
    %607 = vmatpush1.msra.mxu0 0.0
    %608 = vmatprep.subr.mxu0 0.0
    %609 = vmatpush1.msra.mxu0 0.0
    %610 = vmatprep.subr.mxu0 0.0
    %611 = vmatpush1.msra.mxu0 0.0
    %612 = vmatprep.subr.mxu0 0.0
    %613 = vmatpush1.msra.mxu0 0.0
    %614 = vmatprep.subr.mxu0 0.0
    %615 = vmatpush1.msra.mxu0 0.0
    %616 = vmatprep.subr.mxu0 0.0
    %617 = vmatpush1.msra.mxu0 0.0
    %618 = vmatprep.subr.mxu0 0.0
    %619 = vmatpush1.msra.mxu0 0.0
    %620 = vmatprep.subr.mxu0 0.0
    %621 = vmatpush1.msra.mxu0 0.0
    %622 = vmatprep.mubr.f32.mxu0 0.0
    %623 = vmatmul.mubr.f32.gmra.mrb[0].mxu0 %v473
    %v624 = vpop.f32.mrb[0].mxu0
    %v625 = vadd.f32 %v468, %v624
    %v626 = vpop.f32.mrb[0].mxu0
    %v627 = vadd.f32 %v470, %v626
    %628 = vdwg.mxu0
    %629 = vrot.lane.b32.xlu0 %v230, 15
    %v630 = vpop.permute.xlu0 %629
    %631 = vrot.lane.b32.xlu0 %v231, 15
    %v632 = vpop.permute.xlu0 %631
    %633 = vrot.lane.b32.xlu0 %v232, 15
    %v634 = vpop.permute.xlu0 %633
    %635 = vrot.lane.b32.xlu0 %v233, 15
    %v636 = vpop.permute.xlu0 %635
    %vm637 = vcmp.lt.s32.totalorder %v251, 15
    %v638 = vsel %vm637, %v634, %v636
    %v639 = vsel %vm637, %v632, %v634
    %v640 = vsel %vm637, %v630, %v632
    %v641 = vsel %vm637, %v636, %v630
    %v642 = vlaneseq
    %v643 = vshrl.u32 %v642, 7
    %v644 = vsub.s32 2, %v643
    %v645 = vrot.slane %v234, %v644
    %v646 = vlaneseq
    %v647 = vshrl.u32 %v646, 7
    %v648 = vsub.s32 2, %v647
    %v649 = vrot.slane %v235, %v648
    %v650 = vlaneseq
    %v651 = vshrl.u32 %v650, 7
    %v652 = vsub.s32 2, %v651
    %v653 = vrot.slane %v236, %v652
    %v654 = vlaneseq
    %v655 = vshrl.u32 %v654, 7
    %v656 = vsub.s32 2, %v655
    %v657 = vrot.slane %v237, %v656
    %v658 = vmul.f32 %v641, %v645
    %v659 = vmul.f32 %v640, %v649
    %v660 = vmul.f32 %v639, %v653
    %v661 = vmul.f32 %v638, %v657
    %s662 = scalar_lea.vmem %s4, 8
    %v663 = vld [vmem:[%s662] sm:$0xf]
    %v665 = vsel %vm313, %v663, 0
    %v668 = vsel %vm317, %v658, 0
    %v671 = vsel %vm317, %v659, 0
    %v674 = vsel %vm317, %v660, 0
    %v677 = vsel %vm317, %v661, 0
    %679 = vmatprep.subr.mxu0 %v671
    %680 = vmatpush1.msra.mxu0 %v668
    %681 = vmatprep.subr.mxu0 0.0
    %682 = vmatpush1.msra.mxu0 0.0
    %683 = vmatprep.subr.mxu0 0.0
    %684 = vmatpush1.msra.mxu0 0.0
    %685 = vmatprep.subr.mxu0 0.0
    %686 = vmatpush1.msra.mxu0 0.0
    %687 = vmatprep.subr.mxu0 0.0
    %688 = vmatpush1.msra.mxu0 0.0
    %689 = vmatprep.subr.mxu0 0.0
    %690 = vmatpush1.msra.mxu0 0.0
    %691 = vmatprep.subr.mxu0 0.0
    %692 = vmatpush1.msra.mxu0 0.0
    %693 = vmatprep.subr.mxu0 0.0
    %694 = vmatpush1.msra.mxu0 0.0
    %695 = vmatprep.subr.mxu0 0.0
    %696 = vmatpush1.msra.mxu0 0.0
    %697 = vmatprep.subr.mxu0 0.0
    %698 = vmatpush1.msra.mxu0 0.0
    %699 = vmatprep.subr.mxu0 0.0
    %700 = vmatpush1.msra.mxu0 0.0
    %701 = vmatprep.subr.mxu0 0.0
    %702 = vmatpush1.msra.mxu0 0.0
    %703 = vmatprep.subr.mxu0 0.0
    %704 = vmatpush1.msra.mxu0 0.0
    %705 = vmatprep.subr.mxu0 0.0
    %706 = vmatpush1.msra.mxu0 0.0
    %707 = vmatprep.subr.mxu0 0.0
    %708 = vmatpush1.msra.mxu0 0.0
    %709 = vmatprep.subr.mxu0 0.0
    %710 = vmatpush1.msra.mxu0 0.0
    %711 = vmatprep.subr.mxu0 0.0
    %712 = vmatpush1.msra.mxu0 0.0
    %713 = vmatprep.subr.mxu0 0.0
    %714 = vmatpush1.msra.mxu0 0.0
    %715 = vmatprep.subr.mxu0 0.0
    %716 = vmatpush1.msra.mxu0 0.0
    %717 = vmatprep.subr.mxu0 0.0
    %718 = vmatpush1.msra.mxu0 0.0
    %719 = vmatprep.subr.mxu0 0.0
    %720 = vmatpush1.msra.mxu0 0.0
    %721 = vmatprep.subr.mxu0 0.0
    %722 = vmatpush1.msra.mxu0 0.0
    %723 = vmatprep.subr.mxu0 0.0
    %724 = vmatpush1.msra.mxu0 0.0
    %725 = vmatprep.subr.mxu0 0.0
    %726 = vmatpush1.msra.mxu0 0.0
    %727 = vmatprep.subr.mxu0 0.0
    %728 = vmatpush1.msra.mxu0 0.0
    %729 = vmatprep.subr.mxu0 0.0
    %730 = vmatpush1.msra.mxu0 0.0
    %731 = vmatprep.subr.mxu0 0.0
    %732 = vmatpush1.msra.mxu0 0.0
    %733 = vmatprep.subr.mxu0 0.0
    %734 = vmatpush1.msra.mxu0 0.0
    %735 = vmatprep.subr.mxu0 0.0
    %736 = vmatpush1.msra.mxu0 0.0
    %737 = vmatprep.subr.mxu0 0.0
    %738 = vmatpush1.msra.mxu0 0.0
    %739 = vmatprep.subr.mxu0 0.0
    %740 = vmatpush1.msra.mxu0 0.0
    %741 = vmatprep.subr.mxu0 0.0
    %742 = vmatpush1.msra.mxu0 0.0
    %743 = vmatprep.mubr.f32.mxu0 0.0
    %744 = vmatmul.mubr.f32.gmra.mrb[0].mxu0 %v665
    %v745 = vpop.f32.mrb[0].mxu0
    %v746 = vadd.f32 0.0, %v745
    %v747 = vpop.f32.mrb[0].mxu0
    %v748 = vadd.f32 0.0, %v747
    %749 = vdwg.mxu0
    %750 = vmatprep.subr.mxu0 %v677
    %751 = vmatpush1.msra.mxu0 %v674
    %752 = vmatprep.subr.mxu0 0.0
    %753 = vmatpush1.msra.mxu0 0.0
    %754 = vmatprep.subr.mxu0 0.0
    %755 = vmatpush1.msra.mxu0 0.0
    %756 = vmatprep.subr.mxu0 0.0
    %757 = vmatpush1.msra.mxu0 0.0
    %758 = vmatprep.subr.mxu0 0.0
    %759 = vmatpush1.msra.mxu0 0.0
    %760 = vmatprep.subr.mxu0 0.0
    %761 = vmatpush1.msra.mxu0 0.0
    %762 = vmatprep.subr.mxu0 0.0
    %763 = vmatpush1.msra.mxu0 0.0
    %764 = vmatprep.subr.mxu0 0.0
    %765 = vmatpush1.msra.mxu0 0.0
    %766 = vmatprep.subr.mxu0 0.0
    %767 = vmatpush1.msra.mxu0 0.0
    %768 = vmatprep.subr.mxu0 0.0
    %769 = vmatpush1.msra.mxu0 0.0
    %770 = vmatprep.subr.mxu0 0.0
    %771 = vmatpush1.msra.mxu0 0.0
    %772 = vmatprep.subr.mxu0 0.0
    %773 = vmatpush1.msra.mxu0 0.0
    %774 = vmatprep.subr.mxu0 0.0
    %775 = vmatpush1.msra.mxu0 0.0
    %776 = vmatprep.subr.mxu0 0.0
    %777 = vmatpush1.msra.mxu0 0.0
    %778 = vmatprep.subr.mxu0 0.0
    %779 = vmatpush1.msra.mxu0 0.0
    %780 = vmatprep.subr.mxu0 0.0
    %781 = vmatpush1.msra.mxu0 0.0
    %782 = vmatprep.subr.mxu0 0.0
    %783 = vmatpush1.msra.mxu0 0.0
    %784 = vmatprep.subr.mxu0 0.0
    %785 = vmatpush1.msra.mxu0 0.0
    %786 = vmatprep.subr.mxu0 0.0
    %787 = vmatpush1.msra.mxu0 0.0
    %788 = vmatprep.subr.mxu0 0.0
    %789 = vmatpush1.msra.mxu0 0.0
    %790 = vmatprep.subr.mxu0 0.0
    %791 = vmatpush1.msra.mxu0 0.0
    %792 = vmatprep.subr.mxu0 0.0
    %793 = vmatpush1.msra.mxu0 0.0
    %794 = vmatprep.subr.mxu0 0.0
    %795 = vmatpush1.msra.mxu0 0.0
    %796 = vmatprep.subr.mxu0 0.0
    %797 = vmatpush1.msra.mxu0 0.0
    %798 = vmatprep.subr.mxu0 0.0
    %799 = vmatpush1.msra.mxu0 0.0
    %800 = vmatprep.subr.mxu0 0.0
    %801 = vmatpush1.msra.mxu0 0.0
    %802 = vmatprep.subr.mxu0 0.0
    %803 = vmatpush1.msra.mxu0 0.0
    %804 = vmatprep.subr.mxu0 0.0
    %805 = vmatpush1.msra.mxu0 0.0
    %806 = vmatprep.subr.mxu0 0.0
    %807 = vmatpush1.msra.mxu0 0.0
    %808 = vmatprep.subr.mxu0 0.0
    %809 = vmatpush1.msra.mxu0 0.0
    %810 = vmatprep.subr.mxu0 0.0
    %811 = vmatpush1.msra.mxu0 0.0
    %812 = vmatprep.subr.mxu0 0.0
    %813 = vmatpush1.msra.mxu0 0.0
    %814 = vmatprep.mubr.f32.mxu0 0.0
    %815 = vmatmul.mubr.f32.gmra.mrb[0].mxu0 %v665
    %v816 = vpop.f32.mrb[0].mxu0
    %v817 = vadd.f32 0.0, %v816
    %v818 = vpop.f32.mrb[0].mxu0
    %v819 = vadd.f32 0.0, %v818
    %820 = vdwg.mxu0
    %v821 = vadd.f32 %v554, %v746
    %v822 = vadd.f32 %v556, %v748
    %v823 = vadd.f32 %v625, %v817
    %v824 = vadd.f32 %v627, %v819
    %825 = vrot.lane.b32.xlu0 %v230, 1
    %v826 = vpop.permute.xlu0 %825
    %827 = vrot.lane.b32.xlu0 %v231, 1
    %v828 = vpop.permute.xlu0 %827
    %829 = vrot.lane.b32.xlu0 %v232, 1
    %v830 = vpop.permute.xlu0 %829
    %831 = vrot.lane.b32.xlu0 %v233, 1
    %v832 = vpop.permute.xlu0 %831
    %vm833 = vcmp.lt.s32.totalorder %v251, 1
    %v834 = vsel %vm833, %v830, %v832
    %v835 = vsel %vm833, %v828, %v830
    %v836 = vsel %vm833, %v826, %v828
    %v837 = vsel %vm833, %v832, %v826
    %v838 = vlaneseq
    %v839 = vshrl.u32 %v838, 7
    %v840 = vsub.s32 3, %v839
    %v841 = vrot.slane %v234, %v840
    %v842 = vlaneseq
    %v843 = vshrl.u32 %v842, 7
    %v844 = vsub.s32 3, %v843
    %v845 = vrot.slane %v235, %v844
    %v846 = vlaneseq
    %v847 = vshrl.u32 %v846, 7
    %v848 = vsub.s32 3, %v847
    %v849 = vrot.slane %v236, %v848
    %v850 = vlaneseq
    %v851 = vshrl.u32 %v850, 7
    %v852 = vsub.s32 3, %v851
    %v853 = vrot.slane %v237, %v852
    %v854 = vmul.f32 %v837, %v841
    %v855 = vmul.f32 %v836, %v845
    %v856 = vmul.f32 %v835, %v849
    %v857 = vmul.f32 %v834, %v853
    %s858 = scalar_lea.vmem %s4, 12
    %v859 = vld [vmem:[%s858] sm:$0xf]
    %v861 = vsel %vm313, %v859, 0
    %v864 = vsel %vm317, %v854, 0
    %v867 = vsel %vm317, %v855, 0
    %v870 = vsel %vm317, %v856, 0
    %v873 = vsel %vm317, %v857, 0
    %875 = vmatprep.subr.mxu0 %v867
    %876 = vmatpush1.msra.mxu0 %v864
    %877 = vmatprep.subr.mxu0 0.0
    %878 = vmatpush1.msra.mxu0 0.0
    %879 = vmatprep.subr.mxu0 0.0
    %880 = vmatpush1.msra.mxu0 0.0
    %881 = vmatprep.subr.mxu0 0.0
    %882 = vmatpush1.msra.mxu0 0.0
    %883 = vmatprep.subr.mxu0 0.0
    %884 = vmatpush1.msra.mxu0 0.0
    %885 = vmatprep.subr.mxu0 0.0
    %886 = vmatpush1.msra.mxu0 0.0
    %887 = vmatprep.subr.mxu0 0.0
    %888 = vmatpush1.msra.mxu0 0.0
    %889 = vmatprep.subr.mxu0 0.0
    %890 = vmatpush1.msra.mxu0 0.0
    %891 = vmatprep.subr.mxu0 0.0
    %892 = vmatpush1.msra.mxu0 0.0
    %893 = vmatprep.subr.mxu0 0.0
    %894 = vmatpush1.msra.mxu0 0.0
    %895 = vmatprep.subr.mxu0 0.0
    %896 = vmatpush1.msra.mxu0 0.0
    %897 = vmatprep.subr.mxu0 0.0
    %898 = vmatpush1.msra.mxu0 0.0
    %899 = vmatprep.subr.mxu0 0.0
    %900 = vmatpush1.msra.mxu0 0.0
    %901 = vmatprep.subr.mxu0 0.0
    %902 = vmatpush1.msra.mxu0 0.0
    %903 = vmatprep.subr.mxu0 0.0
    %904 = vmatpush1.msra.mxu0 0.0
    %905 = vmatprep.subr.mxu0 0.0
    %906 = vmatpush1.msra.mxu0 0.0
    %907 = vmatprep.subr.mxu0 0.0
    %908 = vmatpush1.msra.mxu0 0.0
    %909 = vmatprep.subr.mxu0 0.0
    %910 = vmatpush1.msra.mxu0 0.0
    %911 = vmatprep.subr.mxu0 0.0
    %912 = vmatpush1.msra.mxu0 0.0
    %913 = vmatprep.subr.mxu0 0.0
    %914 = vmatpush1.msra.mxu0 0.0
    %915 = vmatprep.subr.mxu0 0.0
    %916 = vmatpush1.msra.mxu0 0.0
    %917 = vmatprep.subr.mxu0 0.0
    %918 = vmatpush1.msra.mxu0 0.0
    %919 = vmatprep.subr.mxu0 0.0
    %920 = vmatpush1.msra.mxu0 0.0
    %921 = vmatprep.subr.mxu0 0.0
    %922 = vmatpush1.msra.mxu0 0.0
    %923 = vmatprep.subr.mxu0 0.0
    %924 = vmatpush1.msra.mxu0 0.0
    %925 = vmatprep.subr.mxu0 0.0
    %926 = vmatpush1.msra.mxu0 0.0
    %927 = vmatprep.subr.mxu0 0.0
    %928 = vmatpush1.msra.mxu0 0.0
    %929 = vmatprep.subr.mxu0 0.0
    %930 = vmatpush1.msra.mxu0 0.0
    %931 = vmatprep.subr.mxu0 0.0
    %932 = vmatpush1.msra.mxu0 0.0
    %933 = vmatprep.subr.mxu0 0.0
    %934 = vmatpush1.msra.mxu0 0.0
    %935 = vmatprep.subr.mxu0 0.0
    %936 = vmatpush1.msra.mxu0 0.0
    %937 = vmatprep.subr.mxu0 0.0
    %938 = vmatpush1.msra.mxu0 0.0
    %939 = vmatprep.mubr.f32.mxu0 0.0
    %940 = vmatmul.mubr.f32.gmra.mrb[0].mxu0 %v861
    %v941 = vpop.f32.mrb[0].mxu0
    %v942 = vadd.f32 0.0, %v941
    %v943 = vpop.f32.mrb[0].mxu0
    %v944 = vadd.f32 0.0, %v943
    %945 = vdwg.mxu0
    %946 = vmatprep.subr.mxu0 %v873
    %947 = vmatpush1.msra.mxu0 %v870
    %948 = vmatprep.subr.mxu0 0.0
    %949 = vmatpush1.msra.mxu0 0.0
    %950 = vmatprep.subr.mxu0 0.0
    %951 = vmatpush1.msra.mxu0 0.0
    %952 = vmatprep.subr.mxu0 0.0
    %953 = vmatpush1.msra.mxu0 0.0
    %954 = vmatprep.subr.mxu0 0.0
    %955 = vmatpush1.msra.mxu0 0.0
    %956 = vmatprep.subr.mxu0 0.0
    %957 = vmatpush1.msra.mxu0 0.0
    %958 = vmatprep.subr.mxu0 0.0
    %959 = vmatpush1.msra.mxu0 0.0
    %960 = vmatprep.subr.mxu0 0.0
    %961 = vmatpush1.msra.mxu0 0.0
    %962 = vmatprep.subr.mxu0 0.0
    %963 = vmatpush1.msra.mxu0 0.0
    %964 = vmatprep.subr.mxu0 0.0
    %965 = vmatpush1.msra.mxu0 0.0
    %966 = vmatprep.subr.mxu0 0.0
    %967 = vmatpush1.msra.mxu0 0.0
    %968 = vmatprep.subr.mxu0 0.0
    %969 = vmatpush1.msra.mxu0 0.0
    %970 = vmatprep.subr.mxu0 0.0
    %971 = vmatpush1.msra.mxu0 0.0
    %972 = vmatprep.subr.mxu0 0.0
    %973 = vmatpush1.msra.mxu0 0.0
    %974 = vmatprep.subr.mxu0 0.0
    %975 = vmatpush1.msra.mxu0 0.0
    %976 = vmatprep.subr.mxu0 0.0
    %977 = vmatpush1.msra.mxu0 0.0
    %978 = vmatprep.subr.mxu0 0.0
    %979 = vmatpush1.msra.mxu0 0.0
    %980 = vmatprep.subr.mxu0 0.0
    %981 = vmatpush1.msra.mxu0 0.0
    %982 = vmatprep.subr.mxu0 0.0
    %983 = vmatpush1.msra.mxu0 0.0
    %984 = vmatprep.subr.mxu0 0.0
    %985 = vmatpush1.msra.mxu0 0.0
    %986 = vmatprep.subr.mxu0 0.0
    %987 = vmatpush1.msra.mxu0 0.0
    %988 = vmatprep.subr.mxu0 0.0
    %989 = vmatpush1.msra.mxu0 0.0
    %990 = vmatprep.subr.mxu0 0.0
    %991 = vmatpush1.msra.mxu0 0.0
    %992 = vmatprep.subr.mxu0 0.0
    %993 = vmatpush1.msra.mxu0 0.0
    %994 = vmatprep.subr.mxu0 0.0
    %995 = vmatpush1.msra.mxu0 0.0
    %996 = vmatprep.subr.mxu0 0.0
    %997 = vmatpush1.msra.mxu0 0.0
    %998 = vmatprep.subr.mxu0 0.0
    %999 = vmatpush1.msra.mxu0 0.0
    %1000 = vmatprep.subr.mxu0 0.0
    %1001 = vmatpush1.msra.mxu0 0.0
    %1002 = vmatprep.subr.mxu0 0.0
    %1003 = vmatpush1.msra.mxu0 0.0
    %1004 = vmatprep.subr.mxu0 0.0
    %1005 = vmatpush1.msra.mxu0 0.0
    %1006 = vmatprep.subr.mxu0 0.0
    %1007 = vmatpush1.msra.mxu0 0.0
    %1008 = vmatprep.subr.mxu0 0.0
    %1009 = vmatpush1.msra.mxu0 0.0
    %1010 = vmatprep.mubr.f32.mxu0 0.0
    %1011 = vmatmul.mubr.f32.gmra.mrb[0].mxu0 %v861
    %v1012 = vpop.f32.mrb[0].mxu0
    %v1013 = vadd.f32 0.0, %v1012
    %v1014 = vpop.f32.mrb[0].mxu0
    %v1015 = vadd.f32 0.0, %v1014
    %1016 = vdwg.mxu0
    %v1017 = vadd.f32 %v821, %v942
    %v1018 = vadd.f32 %v822, %v944
    %v1019 = vadd.f32 %v823, %v1013
    %v1020 = vadd.f32 %v824, %v1015
    %v1021 = vlaneseq
    %v1022 = vshrl.u32 %v1021, 7
    %v1023 = vsub.s32 4, %v1022
    %v1024 = vrot.slane %v234, %v1023
    %v1025 = vlaneseq
    %v1026 = vshrl.u32 %v1025, 7
    %v1027 = vsub.s32 4, %v1026
    %v1028 = vrot.slane %v235, %v1027
    %v1029 = vlaneseq
    %v1030 = vshrl.u32 %v1029, 7
    %v1031 = vsub.s32 4, %v1030
    %v1032 = vrot.slane %v236, %v1031
    %v1033 = vlaneseq
    %v1034 = vshrl.u32 %v1033, 7
    %v1035 = vsub.s32 4, %v1034
    %v1036 = vrot.slane %v237, %v1035
    %v1037 = vmul.f32 %v230, %v1024
    %v1038 = vmul.f32 %v231, %v1028
    %v1039 = vmul.f32 %v232, %v1032
    %v1040 = vmul.f32 %v233, %v1036
    %s1041 = scalar_lea.vmem %s4, 16
    %v1042 = vld [vmem:[%s1041] sm:$0xf]
    %v1044 = vsel %vm313, %v1042, 0
    %v1047 = vsel %vm317, %v1037, 0
    %v1050 = vsel %vm317, %v1038, 0
    %v1053 = vsel %vm317, %v1039, 0
    %v1056 = vsel %vm317, %v1040, 0
    %1058 = vmatprep.subr.mxu0 %v1050
    %1059 = vmatpush1.msra.mxu0 %v1047
    %1060 = vmatprep.subr.mxu0 0.0
    %1061 = vmatpush1.msra.mxu0 0.0
    %1062 = vmatprep.subr.mxu0 0.0
    %1063 = vmatpush1.msra.mxu0 0.0
    %1064 = vmatprep.subr.mxu0 0.0
    %1065 = vmatpush1.msra.mxu0 0.0
    %1066 = vmatprep.subr.mxu0 0.0
    %1067 = vmatpush1.msra.mxu0 0.0
    %1068 = vmatprep.subr.mxu0 0.0
    %1069 = vmatpush1.msra.mxu0 0.0
    %1070 = vmatprep.subr.mxu0 0.0
    %1071 = vmatpush1.msra.mxu0 0.0
    %1072 = vmatprep.subr.mxu0 0.0
    %1073 = vmatpush1.msra.mxu0 0.0
    %1074 = vmatprep.subr.mxu0 0.0
    %1075 = vmatpush1.msra.mxu0 0.0
    %1076 = vmatprep.subr.mxu0 0.0
    %1077 = vmatpush1.msra.mxu0 0.0
    %1078 = vmatprep.subr.mxu0 0.0
    %1079 = vmatpush1.msra.mxu0 0.0
    %1080 = vmatprep.subr.mxu0 0.0
    %1081 = vmatpush1.msra.mxu0 0.0
    %1082 = vmatprep.subr.mxu0 0.0
    %1083 = vmatpush1.msra.mxu0 0.0
    %1084 = vmatprep.subr.mxu0 0.0
    %1085 = vmatpush1.msra.mxu0 0.0
    %1086 = vmatprep.subr.mxu0 0.0
    %1087 = vmatpush1.msra.mxu0 0.0
    %1088 = vmatprep.subr.mxu0 0.0
    %1089 = vmatpush1.msra.mxu0 0.0
    %1090 = vmatprep.subr.mxu0 0.0
    %1091 = vmatpush1.msra.mxu0 0.0
    %1092 = vmatprep.subr.mxu0 0.0
    %1093 = vmatpush1.msra.mxu0 0.0
    %1094 = vmatprep.subr.mxu0 0.0
    %1095 = vmatpush1.msra.mxu0 0.0
    %1096 = vmatprep.subr.mxu0 0.0
    %1097 = vmatpush1.msra.mxu0 0.0
    %1098 = vmatprep.subr.mxu0 0.0
    %1099 = vmatpush1.msra.mxu0 0.0
    %1100 = vmatprep.subr.mxu0 0.0
    %1101 = vmatpush1.msra.mxu0 0.0
    %1102 = vmatprep.subr.mxu0 0.0
    %1103 = vmatpush1.msra.mxu0 0.0
    %1104 = vmatprep.subr.mxu0 0.0
    %1105 = vmatpush1.msra.mxu0 0.0
    %1106 = vmatprep.subr.mxu0 0.0
    %1107 = vmatpush1.msra.mxu0 0.0
    %1108 = vmatprep.subr.mxu0 0.0
    %1109 = vmatpush1.msra.mxu0 0.0
    %1110 = vmatprep.subr.mxu0 0.0
    %1111 = vmatpush1.msra.mxu0 0.0
    %1112 = vmatprep.subr.mxu0 0.0
    %1113 = vmatpush1.msra.mxu0 0.0
    %1114 = vmatprep.subr.mxu0 0.0
    %1115 = vmatpush1.msra.mxu0 0.0
    %1116 = vmatprep.subr.mxu0 0.0
    %1117 = vmatpush1.msra.mxu0 0.0
    %1118 = vmatprep.subr.mxu0 0.0
    %1119 = vmatpush1.msra.mxu0 0.0
    %1120 = vmatprep.subr.mxu0 0.0
    %1121 = vmatpush1.msra.mxu0 0.0
    %1122 = vmatprep.mubr.f32.mxu0 0.0
    %1123 = vmatmul.mubr.f32.gmra.mrb[0].mxu0 %v1044
    %v1124 = vpop.f32.mrb[0].mxu0
    %v1125 = vadd.f32 0.0, %v1124
    %v1126 = vpop.f32.mrb[0].mxu0
    %v1127 = vadd.f32 0.0, %v1126
    %1128 = vdwg.mxu0
    %1129 = vmatprep.subr.mxu0 %v1056
    %1130 = vmatpush1.msra.mxu0 %v1053
    %1131 = vmatprep.subr.mxu0 0.0
    %1132 = vmatpush1.msra.mxu0 0.0
    %1133 = vmatprep.subr.mxu0 0.0
    %1134 = vmatpush1.msra.mxu0 0.0
    %1135 = vmatprep.subr.mxu0 0.0
    %1136 = vmatpush1.msra.mxu0 0.0
    %1137 = vmatprep.subr.mxu0 0.0
    %1138 = vmatpush1.msra.mxu0 0.0
    %1139 = vmatprep.subr.mxu0 0.0
    %1140 = vmatpush1.msra.mxu0 0.0
    %1141 = vmatprep.subr.mxu0 0.0
    %1142 = vmatpush1.msra.mxu0 0.0
    %1143 = vmatprep.subr.mxu0 0.0
    %1144 = vmatpush1.msra.mxu0 0.0
    %1145 = vmatprep.subr.mxu0 0.0
    %1146 = vmatpush1.msra.mxu0 0.0
    %1147 = vmatprep.subr.mxu0 0.0
    %1148 = vmatpush1.msra.mxu0 0.0
    %1149 = vmatprep.subr.mxu0 0.0
    %1150 = vmatpush1.msra.mxu0 0.0
    %1151 = vmatprep.subr.mxu0 0.0
    %1152 = vmatpush1.msra.mxu0 0.0
    %1153 = vmatprep.subr.mxu0 0.0
    %1154 = vmatpush1.msra.mxu0 0.0
    %1155 = vmatprep.subr.mxu0 0.0
    %1156 = vmatpush1.msra.mxu0 0.0
    %1157 = vmatprep.subr.mxu0 0.0
    %1158 = vmatpush1.msra.mxu0 0.0
    %1159 = vmatprep.subr.mxu0 0.0
    %1160 = vmatpush1.msra.mxu0 0.0
    %1161 = vmatprep.subr.mxu0 0.0
    %1162 = vmatpush1.msra.mxu0 0.0
    %1163 = vmatprep.subr.mxu0 0.0
    %1164 = vmatpush1.msra.mxu0 0.0
    %1165 = vmatprep.subr.mxu0 0.0
    %1166 = vmatpush1.msra.mxu0 0.0
    %1167 = vmatprep.subr.mxu0 0.0
    %1168 = vmatpush1.msra.mxu0 0.0
    %1169 = vmatprep.subr.mxu0 0.0
    %1170 = vmatpush1.msra.mxu0 0.0
    %1171 = vmatprep.subr.mxu0 0.0
    %1172 = vmatpush1.msra.mxu0 0.0
    %1173 = vmatprep.subr.mxu0 0.0
    %1174 = vmatpush1.msra.mxu0 0.0
    %1175 = vmatprep.subr.mxu0 0.0
    %1176 = vmatpush1.msra.mxu0 0.0
    %1177 = vmatprep.subr.mxu0 0.0
    %1178 = vmatpush1.msra.mxu0 0.0
    %1179 = vmatprep.subr.mxu0 0.0
    %1180 = vmatpush1.msra.mxu0 0.0
    %1181 = vmatprep.subr.mxu0 0.0
    %1182 = vmatpush1.msra.mxu0 0.0
    %1183 = vmatprep.subr.mxu0 0.0
    %1184 = vmatpush1.msra.mxu0 0.0
    %1185 = vmatprep.subr.mxu0 0.0
    %1186 = vmatpush1.msra.mxu0 0.0
    %1187 = vmatprep.subr.mxu0 0.0
    %1188 = vmatpush1.msra.mxu0 0.0
    %1189 = vmatprep.subr.mxu0 0.0
    %1190 = vmatpush1.msra.mxu0 0.0
    %1191 = vmatprep.subr.mxu0 0.0
    %1192 = vmatpush1.msra.mxu0 0.0
    %1193 = vmatprep.mubr.f32.mxu0 0.0
    %1194 = vmatmul.mubr.f32.gmra.mrb[0].mxu0 %v1044
    %v1195 = vpop.f32.mrb[0].mxu0
    %v1196 = vadd.f32 0.0, %v1195
    %v1197 = vpop.f32.mrb[0].mxu0
    %v1198 = vadd.f32 0.0, %v1197
    %1199 = vdwg.mxu0
    %v1200 = vadd.f32 %v1017, %v1125
    %v1201 = vadd.f32 %v1018, %v1127
    %v1202 = vadd.f32 %v1019, %v1196
    %v1203 = vadd.f32 %v1020, %v1198
    %1204 = vrot.lane.b32.xlu0 %v230, 127
    %v1205 = vpop.permute.xlu0 %1204
    %1206 = vrot.lane.b32.xlu0 %v231, 127
    %v1207 = vpop.permute.xlu0 %1206
    %1208 = vrot.lane.b32.xlu0 %v232, 127
    %v1209 = vpop.permute.xlu0 %1208
    %1210 = vrot.lane.b32.xlu0 %v233, 127
    %v1211 = vpop.permute.xlu0 %1210
    %vm1212 = vcmp.lt.s32.totalorder %v251, 127
    %v1213 = vsel %vm1212, %v1209, %v1211
    %v1214 = vsel %vm1212, %v1207, %v1209
    %v1215 = vsel %vm1212, %v1205, %v1207
    %v1216 = vsel %vm1212, %v1211, %v1205
    %v1217 = vlaneseq
    %v1218 = vshrl.u32 %v1217, 7
    %v1219 = vsub.s32 5, %v1218
    %v1220 = vrot.slane %v234, %v1219
    %v1221 = vlaneseq
    %v1222 = vshrl.u32 %v1221, 7
    %v1223 = vsub.s32 5, %v1222
    %v1224 = vrot.slane %v235, %v1223
    %v1225 = vlaneseq
    %v1226 = vshrl.u32 %v1225, 7
    %v1227 = vsub.s32 5, %v1226
    %v1228 = vrot.slane %v236, %v1227
    %v1229 = vlaneseq
    %v1230 = vshrl.u32 %v1229, 7
    %v1231 = vsub.s32 5, %v1230
    %v1232 = vrot.slane %v237, %v1231
    %v1233 = vmul.f32 %v1215, %v1220
    %v1234 = vmul.f32 %v1214, %v1224
    %v1235 = vmul.f32 %v1213, %v1228
    %v1236 = vmul.f32 %v1216, %v1232
    %s1237 = scalar_lea.vmem %s4, 20
    %v1238 = vld [vmem:[%s1237] sm:$0xf]
    %v1240 = vsel %vm313, %v1238, 0
    %v1243 = vsel %vm317, %v1233, 0
    %v1246 = vsel %vm317, %v1234, 0
    %v1249 = vsel %vm317, %v1235, 0
    %v1252 = vsel %vm317, %v1236, 0
    %1254 = vmatprep.subr.mxu0 %v1246
    %1255 = vmatpush1.msra.mxu0 %v1243
    %1256 = vmatprep.subr.mxu0 0.0
    %1257 = vmatpush1.msra.mxu0 0.0
    %1258 = vmatprep.subr.mxu0 0.0
    %1259 = vmatpush1.msra.mxu0 0.0
    %1260 = vmatprep.subr.mxu0 0.0
    %1261 = vmatpush1.msra.mxu0 0.0
    %1262 = vmatprep.subr.mxu0 0.0
    %1263 = vmatpush1.msra.mxu0 0.0
    %1264 = vmatprep.subr.mxu0 0.0
    %1265 = vmatpush1.msra.mxu0 0.0
    %1266 = vmatprep.subr.mxu0 0.0
    %1267 = vmatpush1.msra.mxu0 0.0
    %1268 = vmatprep.subr.mxu0 0.0
    %1269 = vmatpush1.msra.mxu0 0.0
    %1270 = vmatprep.subr.mxu0 0.0
    %1271 = vmatpush1.msra.mxu0 0.0
    %1272 = vmatprep.subr.mxu0 0.0
    %1273 = vmatpush1.msra.mxu0 0.0
    %1274 = vmatprep.subr.mxu0 0.0
    %1275 = vmatpush1.msra.mxu0 0.0
    %1276 = vmatprep.subr.mxu0 0.0
    %1277 = vmatpush1.msra.mxu0 0.0
    %1278 = vmatprep.subr.mxu0 0.0
    %1279 = vmatpush1.msra.mxu0 0.0
    %1280 = vmatprep.subr.mxu0 0.0
    %1281 = vmatpush1.msra.mxu0 0.0
    %1282 = vmatprep.subr.mxu0 0.0
    %1283 = vmatpush1.msra.mxu0 0.0
    %1284 = vmatprep.subr.mxu0 0.0
    %1285 = vmatpush1.msra.mxu0 0.0
    %1286 = vmatprep.subr.mxu0 0.0
    %1287 = vmatpush1.msra.mxu0 0.0
    %1288 = vmatprep.subr.mxu0 0.0
    %1289 = vmatpush1.msra.mxu0 0.0
    %1290 = vmatprep.subr.mxu0 0.0
    %1291 = vmatpush1.msra.mxu0 0.0
    %1292 = vmatprep.subr.mxu0 0.0
    %1293 = vmatpush1.msra.mxu0 0.0
    %1294 = vmatprep.subr.mxu0 0.0
    %1295 = vmatpush1.msra.mxu0 0.0
    %1296 = vmatprep.subr.mxu0 0.0
    %1297 = vmatpush1.msra.mxu0 0.0
    %1298 = vmatprep.subr.mxu0 0.0
    %1299 = vmatpush1.msra.mxu0 0.0
    %1300 = vmatprep.subr.mxu0 0.0
    %1301 = vmatpush1.msra.mxu0 0.0
    %1302 = vmatprep.subr.mxu0 0.0
    %1303 = vmatpush1.msra.mxu0 0.0
    %1304 = vmatprep.subr.mxu0 0.0
    %1305 = vmatpush1.msra.mxu0 0.0
    %1306 = vmatprep.subr.mxu0 0.0
    %1307 = vmatpush1.msra.mxu0 0.0
    %1308 = vmatprep.subr.mxu0 0.0
    %1309 = vmatpush1.msra.mxu0 0.0
    %1310 = vmatprep.subr.mxu0 0.0
    %1311 = vmatpush1.msra.mxu0 0.0
    %1312 = vmatprep.subr.mxu0 0.0
    %1313 = vmatpush1.msra.mxu0 0.0
    %1314 = vmatprep.subr.mxu0 0.0
    %1315 = vmatpush1.msra.mxu0 0.0
    %1316 = vmatprep.subr.mxu0 0.0
    %1317 = vmatpush1.msra.mxu0 0.0
    %1318 = vmatprep.mubr.f32.mxu0 0.0
    %1319 = vmatmul.mubr.f32.gmra.mrb[0].mxu0 %v1240
    %v1320 = vpop.f32.mrb[0].mxu0
    %v1321 = vadd.f32 0.0, %v1320
    %v1322 = vpop.f32.mrb[0].mxu0
    %v1323 = vadd.f32 0.0, %v1322
    %1324 = vdwg.mxu0
    %1325 = vmatprep.subr.mxu0 %v1252
    %1326 = vmatpush1.msra.mxu0 %v1249
    %1327 = vmatprep.subr.mxu0 0.0
    %1328 = vmatpush1.msra.mxu0 0.0
    %1329 = vmatprep.subr.mxu0 0.0
    %1330 = vmatpush1.msra.mxu0 0.0
    %1331 = vmatprep.subr.mxu0 0.0
    %1332 = vmatpush1.msra.mxu0 0.0
    %1333 = vmatprep.subr.mxu0 0.0
    %1334 = vmatpush1.msra.mxu0 0.0
    %1335 = vmatprep.subr.mxu0 0.0
    %1336 = vmatpush1.msra.mxu0 0.0
    %1337 = vmatprep.subr.mxu0 0.0
    %1338 = vmatpush1.msra.mxu0 0.0
    %1339 = vmatprep.subr.mxu0 0.0
    %1340 = vmatpush1.msra.mxu0 0.0
    %1341 = vmatprep.subr.mxu0 0.0
    %1342 = vmatpush1.msra.mxu0 0.0
    %1343 = vmatprep.subr.mxu0 0.0
    %1344 = vmatpush1.msra.mxu0 0.0
    %1345 = vmatprep.subr.mxu0 0.0
    %1346 = vmatpush1.msra.mxu0 0.0
    %1347 = vmatprep.subr.mxu0 0.0
    %1348 = vmatpush1.msra.mxu0 0.0
    %1349 = vmatprep.subr.mxu0 0.0
    %1350 = vmatpush1.msra.mxu0 0.0
    %1351 = vmatprep.subr.mxu0 0.0
    %1352 = vmatpush1.msra.mxu0 0.0
    %1353 = vmatprep.subr.mxu0 0.0
    %1354 = vmatpush1.msra.mxu0 0.0
    %1355 = vmatprep.subr.mxu0 0.0
    %1356 = vmatpush1.msra.mxu0 0.0
    %1357 = vmatprep.subr.mxu0 0.0
    %1358 = vmatpush1.msra.mxu0 0.0
    %1359 = vmatprep.subr.mxu0 0.0
    %1360 = vmatpush1.msra.mxu0 0.0
    %1361 = vmatprep.subr.mxu0 0.0
    %1362 = vmatpush1.msra.mxu0 0.0
    %1363 = vmatprep.subr.mxu0 0.0
    %1364 = vmatpush1.msra.mxu0 0.0
    %1365 = vmatprep.subr.mxu0 0.0
    %1366 = vmatpush1.msra.mxu0 0.0
    %1367 = vmatprep.subr.mxu0 0.0
    %1368 = vmatpush1.msra.mxu0 0.0
    %1369 = vmatprep.subr.mxu0 0.0
    %1370 = vmatpush1.msra.mxu0 0.0
    %1371 = vmatprep.subr.mxu0 0.0
    %1372 = vmatpush1.msra.mxu0 0.0
    %1373 = vmatprep.subr.mxu0 0.0
    %1374 = vmatpush1.msra.mxu0 0.0
    %1375 = vmatprep.subr.mxu0 0.0
    %1376 = vmatpush1.msra.mxu0 0.0
    %1377 = vmatprep.subr.mxu0 0.0
    %1378 = vmatpush1.msra.mxu0 0.0
    %1379 = vmatprep.subr.mxu0 0.0
    %1380 = vmatpush1.msra.mxu0 0.0
    %1381 = vmatprep.subr.mxu0 0.0
    %1382 = vmatpush1.msra.mxu0 0.0
    %1383 = vmatprep.subr.mxu0 0.0
    %1384 = vmatpush1.msra.mxu0 0.0
    %1385 = vmatprep.subr.mxu0 0.0
    %1386 = vmatpush1.msra.mxu0 0.0
    %1387 = vmatprep.subr.mxu0 0.0
    %1388 = vmatpush1.msra.mxu0 0.0
    %1389 = vmatprep.mubr.f32.mxu0 0.0
    %1390 = vmatmul.mubr.f32.gmra.mrb[0].mxu0 %v1240
    %v1391 = vpop.f32.mrb[0].mxu0
    %v1392 = vadd.f32 0.0, %v1391
    %v1393 = vpop.f32.mrb[0].mxu0
    %v1394 = vadd.f32 0.0, %v1393
    %1395 = vdwg.mxu0
    %v1396 = vadd.f32 %v1200, %v1321
    %v1397 = vadd.f32 %v1201, %v1323
    %v1398 = vadd.f32 %v1202, %v1392
    %v1399 = vadd.f32 %v1203, %v1394
    %1400 = vrot.lane.b32.xlu0 %v230, 113
    %v1401 = vpop.permute.xlu0 %1400
    %1402 = vrot.lane.b32.xlu0 %v231, 113
    %v1403 = vpop.permute.xlu0 %1402
    %1404 = vrot.lane.b32.xlu0 %v232, 113
    %v1405 = vpop.permute.xlu0 %1404
    %1406 = vrot.lane.b32.xlu0 %v233, 113
    %v1407 = vpop.permute.xlu0 %1406
    %vm1408 = vcmp.lt.s32.totalorder %v251, 113
    %v1409 = vsel %vm1408, %v1405, %v1407
    %v1410 = vsel %vm1408, %v1403, %v1405
    %v1411 = vsel %vm1408, %v1401, %v1403
    %v1412 = vsel %vm1408, %v1407, %v1401
    %v1413 = vlaneseq
    %v1414 = vshrl.u32 %v1413, 7
    %v1415 = vsub.s32 6, %v1414
    %v1416 = vrot.slane %v234, %v1415
    %v1417 = vlaneseq
    %v1418 = vshrl.u32 %v1417, 7
    %v1419 = vsub.s32 6, %v1418
    %v1420 = vrot.slane %v235, %v1419
    %v1421 = vlaneseq
    %v1422 = vshrl.u32 %v1421, 7
    %v1423 = vsub.s32 6, %v1422
    %v1424 = vrot.slane %v236, %v1423
    %v1425 = vlaneseq
    %v1426 = vshrl.u32 %v1425, 7
    %v1427 = vsub.s32 6, %v1426
    %v1428 = vrot.slane %v237, %v1427
    %v1429 = vmul.f32 %v1411, %v1416
    %v1430 = vmul.f32 %v1410, %v1420
    %v1431 = vmul.f32 %v1409, %v1424
    %v1432 = vmul.f32 %v1412, %v1428
    %s1433 = scalar_lea.vmem %s4, 24
    %v1434 = vld [vmem:[%s1433] sm:$0xf]
    %v1436 = vsel %vm313, %v1434, 0
    %v1439 = vsel %vm317, %v1429, 0
    %v1442 = vsel %vm317, %v1430, 0
    %v1445 = vsel %vm317, %v1431, 0
    %v1448 = vsel %vm317, %v1432, 0
    %1450 = vmatprep.subr.mxu0 %v1442
    %1451 = vmatpush1.msra.mxu0 %v1439
    %1452 = vmatprep.subr.mxu0 0.0
    %1453 = vmatpush1.msra.mxu0 0.0
    %1454 = vmatprep.subr.mxu0 0.0
    %1455 = vmatpush1.msra.mxu0 0.0
    %1456 = vmatprep.subr.mxu0 0.0
    %1457 = vmatpush1.msra.mxu0 0.0
    %1458 = vmatprep.subr.mxu0 0.0
    %1459 = vmatpush1.msra.mxu0 0.0
    %1460 = vmatprep.subr.mxu0 0.0
    %1461 = vmatpush1.msra.mxu0 0.0
    %1462 = vmatprep.subr.mxu0 0.0
    %1463 = vmatpush1.msra.mxu0 0.0
    %1464 = vmatprep.subr.mxu0 0.0
    %1465 = vmatpush1.msra.mxu0 0.0
    %1466 = vmatprep.subr.mxu0 0.0
    %1467 = vmatpush1.msra.mxu0 0.0
    %1468 = vmatprep.subr.mxu0 0.0
    %1469 = vmatpush1.msra.mxu0 0.0
    %1470 = vmatprep.subr.mxu0 0.0
    %1471 = vmatpush1.msra.mxu0 0.0
    %1472 = vmatprep.subr.mxu0 0.0
    %1473 = vmatpush1.msra.mxu0 0.0
    %1474 = vmatprep.subr.mxu0 0.0
    %1475 = vmatpush1.msra.mxu0 0.0
    %1476 = vmatprep.subr.mxu0 0.0
    %1477 = vmatpush1.msra.mxu0 0.0
    %1478 = vmatprep.subr.mxu0 0.0
    %1479 = vmatpush1.msra.mxu0 0.0
    %1480 = vmatprep.subr.mxu0 0.0
    %1481 = vmatpush1.msra.mxu0 0.0
    %1482 = vmatprep.subr.mxu0 0.0
    %1483 = vmatpush1.msra.mxu0 0.0
    %1484 = vmatprep.subr.mxu0 0.0
    %1485 = vmatpush1.msra.mxu0 0.0
    %1486 = vmatprep.subr.mxu0 0.0
    %1487 = vmatpush1.msra.mxu0 0.0
    %1488 = vmatprep.subr.mxu0 0.0
    %1489 = vmatpush1.msra.mxu0 0.0
    %1490 = vmatprep.subr.mxu0 0.0
    %1491 = vmatpush1.msra.mxu0 0.0
    %1492 = vmatprep.subr.mxu0 0.0
    %1493 = vmatpush1.msra.mxu0 0.0
    %1494 = vmatprep.subr.mxu0 0.0
    %1495 = vmatpush1.msra.mxu0 0.0
    %1496 = vmatprep.subr.mxu0 0.0
    %1497 = vmatpush1.msra.mxu0 0.0
    %1498 = vmatprep.subr.mxu0 0.0
    %1499 = vmatpush1.msra.mxu0 0.0
    %1500 = vmatprep.subr.mxu0 0.0
    %1501 = vmatpush1.msra.mxu0 0.0
    %1502 = vmatprep.subr.mxu0 0.0
    %1503 = vmatpush1.msra.mxu0 0.0
    %1504 = vmatprep.subr.mxu0 0.0
    %1505 = vmatpush1.msra.mxu0 0.0
    %1506 = vmatprep.subr.mxu0 0.0
    %1507 = vmatpush1.msra.mxu0 0.0
    %1508 = vmatprep.subr.mxu0 0.0
    %1509 = vmatpush1.msra.mxu0 0.0
    %1510 = vmatprep.subr.mxu0 0.0
    %1511 = vmatpush1.msra.mxu0 0.0
    %1512 = vmatprep.subr.mxu0 0.0
    %1513 = vmatpush1.msra.mxu0 0.0
    %1514 = vmatprep.mubr.f32.mxu0 0.0
    %1515 = vmatmul.mubr.f32.gmra.mrb[0].mxu0 %v1436
    %v1516 = vpop.f32.mrb[0].mxu0
    %v1517 = vadd.f32 0.0, %v1516
    %v1518 = vpop.f32.mrb[0].mxu0
    %v1519 = vadd.f32 0.0, %v1518
    %1520 = vdwg.mxu0
    %1521 = vmatprep.subr.mxu0 %v1448
    %1522 = vmatpush1.msra.mxu0 %v1445
    %1523 = vmatprep.subr.mxu0 0.0
    %1524 = vmatpush1.msra.mxu0 0.0
    %1525 = vmatprep.subr.mxu0 0.0
    %1526 = vmatpush1.msra.mxu0 0.0
    %1527 = vmatprep.subr.mxu0 0.0
    %1528 = vmatpush1.msra.mxu0 0.0
    %1529 = vmatprep.subr.mxu0 0.0
    %1530 = vmatpush1.msra.mxu0 0.0
    %1531 = vmatprep.subr.mxu0 0.0
    %1532 = vmatpush1.msra.mxu0 0.0
    %1533 = vmatprep.subr.mxu0 0.0
    %1534 = vmatpush1.msra.mxu0 0.0
    %1535 = vmatprep.subr.mxu0 0.0
    %1536 = vmatpush1.msra.mxu0 0.0
    %1537 = vmatprep.subr.mxu0 0.0
    %1538 = vmatpush1.msra.mxu0 0.0
    %1539 = vmatprep.subr.mxu0 0.0
    %1540 = vmatpush1.msra.mxu0 0.0
    %1541 = vmatprep.subr.mxu0 0.0
    %1542 = vmatpush1.msra.mxu0 0.0
    %1543 = vmatprep.subr.mxu0 0.0
    %1544 = vmatpush1.msra.mxu0 0.0
    %1545 = vmatprep.subr.mxu0 0.0
    %1546 = vmatpush1.msra.mxu0 0.0
    %1547 = vmatprep.subr.mxu0 0.0
    %1548 = vmatpush1.msra.mxu0 0.0
    %1549 = vmatprep.subr.mxu0 0.0
    %1550 = vmatpush1.msra.mxu0 0.0
    %1551 = vmatprep.subr.mxu0 0.0
    %1552 = vmatpush1.msra.mxu0 0.0
    %1553 = vmatprep.subr.mxu0 0.0
    %1554 = vmatpush1.msra.mxu0 0.0
    %1555 = vmatprep.subr.mxu0 0.0
    %1556 = vmatpush1.msra.mxu0 0.0
    %1557 = vmatprep.subr.mxu0 0.0
    %1558 = vmatpush1.msra.mxu0 0.0
    %1559 = vmatprep.subr.mxu0 0.0
    %1560 = vmatpush1.msra.mxu0 0.0
    %1561 = vmatprep.subr.mxu0 0.0
    %1562 = vmatpush1.msra.mxu0 0.0
    %1563 = vmatprep.subr.mxu0 0.0
    %1564 = vmatpush1.msra.mxu0 0.0
    %1565 = vmatprep.subr.mxu0 0.0
    %1566 = vmatpush1.msra.mxu0 0.0
    %1567 = vmatprep.subr.mxu0 0.0
    %1568 = vmatpush1.msra.mxu0 0.0
    %1569 = vmatprep.subr.mxu0 0.0
    %1570 = vmatpush1.msra.mxu0 0.0
    %1571 = vmatprep.subr.mxu0 0.0
    %1572 = vmatpush1.msra.mxu0 0.0
    %1573 = vmatprep.subr.mxu0 0.0
    %1574 = vmatpush1.msra.mxu0 0.0
    %1575 = vmatprep.subr.mxu0 0.0
    %1576 = vmatpush1.msra.mxu0 0.0
    %1577 = vmatprep.subr.mxu0 0.0
    %1578 = vmatpush1.msra.mxu0 0.0
    %1579 = vmatprep.subr.mxu0 0.0
    %1580 = vmatpush1.msra.mxu0 0.0
    %1581 = vmatprep.subr.mxu0 0.0
    %1582 = vmatpush1.msra.mxu0 0.0
    %1583 = vmatprep.subr.mxu0 0.0
    %1584 = vmatpush1.msra.mxu0 0.0
    %1585 = vmatprep.mubr.f32.mxu0 0.0
    %1586 = vmatmul.mubr.f32.gmra.mrb[0].mxu0 %v1436
    %v1587 = vpop.f32.mrb[0].mxu0
    %v1588 = vadd.f32 0.0, %v1587
    %v1589 = vpop.f32.mrb[0].mxu0
    %v1590 = vadd.f32 0.0, %v1589
    %1591 = vdwg.mxu0
    %v1592 = vadd.f32 %v1396, %v1517
    %v1593 = vadd.f32 %v1397, %v1519
    %v1594 = vadd.f32 %v1398, %v1588
    %v1595 = vadd.f32 %v1399, %v1590
    %1596 = vrot.lane.b32.xlu0 %v230, 112
    %v1597 = vpop.permute.xlu0 %1596
    %1598 = vrot.lane.b32.xlu0 %v231, 112
    %v1599 = vpop.permute.xlu0 %1598
    %1600 = vrot.lane.b32.xlu0 %v232, 112
    %v1601 = vpop.permute.xlu0 %1600
    %1602 = vrot.lane.b32.xlu0 %v233, 112
    %v1603 = vpop.permute.xlu0 %1602
    %vm1604 = vcmp.lt.s32.totalorder %v251, 112
    %v1605 = vsel %vm1604, %v1601, %v1603
    %v1606 = vsel %vm1604, %v1599, %v1601
    %v1607 = vsel %vm1604, %v1597, %v1599
    %v1608 = vsel %vm1604, %v1603, %v1597
    %v1609 = vlaneseq
    %v1610 = vshrl.u32 %v1609, 7
    %v1611 = vsub.s32 7, %v1610
    %v1612 = vrot.slane %v234, %v1611
    %v1613 = vlaneseq
    %v1614 = vshrl.u32 %v1613, 7
    %v1615 = vsub.s32 7, %v1614
    %v1616 = vrot.slane %v235, %v1615
    %v1617 = vlaneseq
    %v1618 = vshrl.u32 %v1617, 7
    %v1619 = vsub.s32 7, %v1618
    %v1620 = vrot.slane %v236, %v1619
    %v1621 = vlaneseq
    %v1622 = vshrl.u32 %v1621, 7
    %v1623 = vsub.s32 7, %v1622
    %v1624 = vrot.slane %v237, %v1623
    %v1625 = vmul.f32 %v1607, %v1612
    %v1626 = vmul.f32 %v1606, %v1616
    %v1627 = vmul.f32 %v1605, %v1620
    %v1628 = vmul.f32 %v1608, %v1624
    %s1629 = scalar_lea.vmem %s4, 28
    %v1630 = vld [vmem:[%s1629] sm:$0xf]
    %v1632 = vsel %vm313, %v1630, 0
    %v1635 = vsel %vm317, %v1625, 0
    %v1638 = vsel %vm317, %v1626, 0
    %v1641 = vsel %vm317, %v1627, 0
    %v1644 = vsel %vm317, %v1628, 0
    %1646 = vmatprep.subr.mxu0 %v1638
    %1647 = vmatpush1.msra.mxu0 %v1635
    %1648 = vmatprep.subr.mxu0 0.0
    %1649 = vmatpush1.msra.mxu0 0.0
    %1650 = vmatprep.subr.mxu0 0.0
    %1651 = vmatpush1.msra.mxu0 0.0
    %1652 = vmatprep.subr.mxu0 0.0
    %1653 = vmatpush1.msra.mxu0 0.0
    %1654 = vmatprep.subr.mxu0 0.0
    %1655 = vmatpush1.msra.mxu0 0.0
    %1656 = vmatprep.subr.mxu0 0.0
    %1657 = vmatpush1.msra.mxu0 0.0
    %1658 = vmatprep.subr.mxu0 0.0
    %1659 = vmatpush1.msra.mxu0 0.0
    %1660 = vmatprep.subr.mxu0 0.0
    %1661 = vmatpush1.msra.mxu0 0.0
    %1662 = vmatprep.subr.mxu0 0.0
    %1663 = vmatpush1.msra.mxu0 0.0
    %1664 = vmatprep.subr.mxu0 0.0
    %1665 = vmatpush1.msra.mxu0 0.0
    %1666 = vmatprep.subr.mxu0 0.0
    %1667 = vmatpush1.msra.mxu0 0.0
    %1668 = vmatprep.subr.mxu0 0.0
    %1669 = vmatpush1.msra.mxu0 0.0
    %1670 = vmatprep.subr.mxu0 0.0
    %1671 = vmatpush1.msra.mxu0 0.0
    %1672 = vmatprep.subr.mxu0 0.0
    %1673 = vmatpush1.msra.mxu0 0.0
    %1674 = vmatprep.subr.mxu0 0.0
    %1675 = vmatpush1.msra.mxu0 0.0
    %1676 = vmatprep.subr.mxu0 0.0
    %1677 = vmatpush1.msra.mxu0 0.0
    %1678 = vmatprep.subr.mxu0 0.0
    %1679 = vmatpush1.msra.mxu0 0.0
    %1680 = vmatprep.subr.mxu0 0.0
    %1681 = vmatpush1.msra.mxu0 0.0
    %1682 = vmatprep.subr.mxu0 0.0
    %1683 = vmatpush1.msra.mxu0 0.0
    %1684 = vmatprep.subr.mxu0 0.0
    %1685 = vmatpush1.msra.mxu0 0.0
    %1686 = vmatprep.subr.mxu0 0.0
    %1687 = vmatpush1.msra.mxu0 0.0
    %1688 = vmatprep.subr.mxu0 0.0
    %1689 = vmatpush1.msra.mxu0 0.0
    %1690 = vmatprep.subr.mxu0 0.0
    %1691 = vmatpush1.msra.mxu0 0.0
    %1692 = vmatprep.subr.mxu0 0.0
    %1693 = vmatpush1.msra.mxu0 0.0
    %1694 = vmatprep.subr.mxu0 0.0
    %1695 = vmatpush1.msra.mxu0 0.0
    %1696 = vmatprep.subr.mxu0 0.0
    %1697 = vmatpush1.msra.mxu0 0.0
    %1698 = vmatprep.subr.mxu0 0.0
    %1699 = vmatpush1.msra.mxu0 0.0
    %1700 = vmatprep.subr.mxu0 0.0
    %1701 = vmatpush1.msra.mxu0 0.0
    %1702 = vmatprep.subr.mxu0 0.0
    %1703 = vmatpush1.msra.mxu0 0.0
    %1704 = vmatprep.subr.mxu0 0.0
    %1705 = vmatpush1.msra.mxu0 0.0
    %1706 = vmatprep.subr.mxu0 0.0
    %1707 = vmatpush1.msra.mxu0 0.0
    %1708 = vmatprep.subr.mxu0 0.0
    %1709 = vmatpush1.msra.mxu0 0.0
    %1710 = vmatprep.mubr.f32.mxu0 0.0
    %1711 = vmatmul.mubr.f32.gmra.mrb[0].mxu0 %v1632
    %v1712 = vpop.f32.mrb[0].mxu0
    %v1713 = vadd.f32 0.0, %v1712
    %v1714 = vpop.f32.mrb[0].mxu0
    %v1715 = vadd.f32 0.0, %v1714
    %1716 = vdwg.mxu0
    %1717 = vmatprep.subr.mxu0 %v1644
    %1718 = vmatpush1.msra.mxu0 %v1641
    %1719 = vmatprep.subr.mxu0 0.0
    %1720 = vmatpush1.msra.mxu0 0.0
    %1721 = vmatprep.subr.mxu0 0.0
    %1722 = vmatpush1.msra.mxu0 0.0
    %1723 = vmatprep.subr.mxu0 0.0
    %1724 = vmatpush1.msra.mxu0 0.0
    %1725 = vmatprep.subr.mxu0 0.0
    %1726 = vmatpush1.msra.mxu0 0.0
    %1727 = vmatprep.subr.mxu0 0.0
    %1728 = vmatpush1.msra.mxu0 0.0
    %1729 = vmatprep.subr.mxu0 0.0
    %1730 = vmatpush1.msra.mxu0 0.0
    %1731 = vmatprep.subr.mxu0 0.0
    %1732 = vmatpush1.msra.mxu0 0.0
    %1733 = vmatprep.subr.mxu0 0.0
    %1734 = vmatpush1.msra.mxu0 0.0
    %1735 = vmatprep.subr.mxu0 0.0
    %1736 = vmatpush1.msra.mxu0 0.0
    %1737 = vmatprep.subr.mxu0 0.0
    %1738 = vmatpush1.msra.mxu0 0.0
    %1739 = vmatprep.subr.mxu0 0.0
    %1740 = vmatpush1.msra.mxu0 0.0
    %1741 = vmatprep.subr.mxu0 0.0
    %1742 = vmatpush1.msra.mxu0 0.0
    %1743 = vmatprep.subr.mxu0 0.0
    %1744 = vmatpush1.msra.mxu0 0.0
    %1745 = vmatprep.subr.mxu0 0.0
    %1746 = vmatpush1.msra.mxu0 0.0
    %1747 = vmatprep.subr.mxu0 0.0
    %1748 = vmatpush1.msra.mxu0 0.0
    %1749 = vmatprep.subr.mxu0 0.0
    %1750 = vmatpush1.msra.mxu0 0.0
    %1751 = vmatprep.subr.mxu0 0.0
    %1752 = vmatpush1.msra.mxu0 0.0
    %1753 = vmatprep.subr.mxu0 0.0
    %1754 = vmatpush1.msra.mxu0 0.0
    %1755 = vmatprep.subr.mxu0 0.0
    %1756 = vmatpush1.msra.mxu0 0.0
    %1757 = vmatprep.subr.mxu0 0.0
    %1758 = vmatpush1.msra.mxu0 0.0
    %1759 = vmatprep.subr.mxu0 0.0
    %1760 = vmatpush1.msra.mxu0 0.0
    %1761 = vmatprep.subr.mxu0 0.0
    %1762 = vmatpush1.msra.mxu0 0.0
    %1763 = vmatprep.subr.mxu0 0.0
    %1764 = vmatpush1.msra.mxu0 0.0
    %1765 = vmatprep.subr.mxu0 0.0
    %1766 = vmatpush1.msra.mxu0 0.0
    %1767 = vmatprep.subr.mxu0 0.0
    %1768 = vmatpush1.msra.mxu0 0.0
    %1769 = vmatprep.subr.mxu0 0.0
    %1770 = vmatpush1.msra.mxu0 0.0
    %1771 = vmatprep.subr.mxu0 0.0
    %1772 = vmatpush1.msra.mxu0 0.0
    %1773 = vmatprep.subr.mxu0 0.0
    %1774 = vmatpush1.msra.mxu0 0.0
    %1775 = vmatprep.subr.mxu0 0.0
    %1776 = vmatpush1.msra.mxu0 0.0
    %1777 = vmatprep.subr.mxu0 0.0
    %1778 = vmatpush1.msra.mxu0 0.0
    %1779 = vmatprep.subr.mxu0 0.0
    %1780 = vmatpush1.msra.mxu0 0.0
    %1781 = vmatprep.mubr.f32.mxu0 0.0
    %1782 = vmatmul.mubr.f32.gmra.mrb[0].mxu0 %v1632
    %v1783 = vpop.f32.mrb[0].mxu0
    %v1784 = vadd.f32 0.0, %v1783
    %v1785 = vpop.f32.mrb[0].mxu0
    %v1786 = vadd.f32 0.0, %v1785
    %1787 = vdwg.mxu0
    %v1788 = vadd.f32 %v1592, %v1713
    %v1789 = vadd.f32 %v1593, %v1715
    %v1790 = vadd.f32 %v1594, %v1784
    %v1791 = vadd.f32 %v1595, %v1786
    %1792 = vrot.lane.b32.xlu0 %v230, 111
    %v1793 = vpop.permute.xlu0 %1792
    %1794 = vrot.lane.b32.xlu0 %v231, 111
    %v1795 = vpop.permute.xlu0 %1794
    %1796 = vrot.lane.b32.xlu0 %v232, 111
    %v1797 = vpop.permute.xlu0 %1796
    %1798 = vrot.lane.b32.xlu0 %v233, 111
    %v1799 = vpop.permute.xlu0 %1798
    %vm1800 = vcmp.lt.s32.totalorder %v251, 111
    %v1801 = vsel %vm1800, %v1797, %v1799
    %v1802 = vsel %vm1800, %v1795, %v1797
    %v1803 = vsel %vm1800, %v1793, %v1795
    %v1804 = vsel %vm1800, %v1799, %v1793
    %v1805 = vlaneseq
    %v1806 = vshrl.u32 %v1805, 7
    %v1807 = vsub.s32 0, %v1806
    %v1808 = vrot.slane %v238, %v1807
    %v1809 = vlaneseq
    %v1810 = vshrl.u32 %v1809, 7
    %v1811 = vsub.s32 0, %v1810
    %v1812 = vrot.slane %v239, %v1811
    %v1813 = vlaneseq
    %v1814 = vshrl.u32 %v1813, 7
    %v1815 = vsub.s32 0, %v1814
    %v1816 = vrot.slane %v240, %v1815
    %v1817 = vlaneseq
    %v1818 = vshrl.u32 %v1817, 7
    %v1819 = vsub.s32 0, %v1818
    %v1820 = vrot.slane %v241, %v1819
    %v1821 = vmul.f32 %v1803, %v1808
    %v1822 = vmul.f32 %v1802, %v1812
    %v1823 = vmul.f32 %v1801, %v1816
    %v1824 = vmul.f32 %v1804, %v1820
    %s1825 = scalar_lea.vmem %s4, 32
    %v1826 = vld [vmem:[%s1825] sm:$0xf]
    %v1828 = vsel %vm313, %v1826, 0
    %v1831 = vsel %vm317, %v1821, 0
    %v1834 = vsel %vm317, %v1822, 0
    %v1837 = vsel %vm317, %v1823, 0
    %v1840 = vsel %vm317, %v1824, 0
    %1842 = vmatprep.subr.mxu0 %v1834
    %1843 = vmatpush1.msra.mxu0 %v1831
    %1844 = vmatprep.subr.mxu0 0.0
    %1845 = vmatpush1.msra.mxu0 0.0
    %1846 = vmatprep.subr.mxu0 0.0
    %1847 = vmatpush1.msra.mxu0 0.0
    %1848 = vmatprep.subr.mxu0 0.0
    %1849 = vmatpush1.msra.mxu0 0.0
    %1850 = vmatprep.subr.mxu0 0.0
    %1851 = vmatpush1.msra.mxu0 0.0
    %1852 = vmatprep.subr.mxu0 0.0
    %1853 = vmatpush1.msra.mxu0 0.0
    %1854 = vmatprep.subr.mxu0 0.0
    %1855 = vmatpush1.msra.mxu0 0.0
    %1856 = vmatprep.subr.mxu0 0.0
    %1857 = vmatpush1.msra.mxu0 0.0
    %1858 = vmatprep.subr.mxu0 0.0
    %1859 = vmatpush1.msra.mxu0 0.0
    %1860 = vmatprep.subr.mxu0 0.0
    %1861 = vmatpush1.msra.mxu0 0.0
    %1862 = vmatprep.subr.mxu0 0.0
    %1863 = vmatpush1.msra.mxu0 0.0
    %1864 = vmatprep.subr.mxu0 0.0
    %1865 = vmatpush1.msra.mxu0 0.0
    %1866 = vmatprep.subr.mxu0 0.0
    %1867 = vmatpush1.msra.mxu0 0.0
    %1868 = vmatprep.subr.mxu0 0.0
    %1869 = vmatpush1.msra.mxu0 0.0
    %1870 = vmatprep.subr.mxu0 0.0
    %1871 = vmatpush1.msra.mxu0 0.0
    %1872 = vmatprep.subr.mxu0 0.0
    %1873 = vmatpush1.msra.mxu0 0.0
    %1874 = vmatprep.subr.mxu0 0.0
    %1875 = vmatpush1.msra.mxu0 0.0
    %1876 = vmatprep.subr.mxu0 0.0
    %1877 = vmatpush1.msra.mxu0 0.0
    %1878 = vmatprep.subr.mxu0 0.0
    %1879 = vmatpush1.msra.mxu0 0.0
    %1880 = vmatprep.subr.mxu0 0.0
    %1881 = vmatpush1.msra.mxu0 0.0
    %1882 = vmatprep.subr.mxu0 0.0
    %1883 = vmatpush1.msra.mxu0 0.0
    %1884 = vmatprep.subr.mxu0 0.0
    %1885 = vmatpush1.msra.mxu0 0.0
    %1886 = vmatprep.subr.mxu0 0.0
    %1887 = vmatpush1.msra.mxu0 0.0
    %1888 = vmatprep.subr.mxu0 0.0
    %1889 = vmatpush1.msra.mxu0 0.0
    %1890 = vmatprep.subr.mxu0 0.0
    %1891 = vmatpush1.msra.mxu0 0.0
    %1892 = vmatprep.subr.mxu0 0.0
    %1893 = vmatpush1.msra.mxu0 0.0
    %1894 = vmatprep.subr.mxu0 0.0
    %1895 = vmatpush1.msra.mxu0 0.0
    %1896 = vmatprep.subr.mxu0 0.0
    %1897 = vmatpush1.msra.mxu0 0.0
    %1898 = vmatprep.subr.mxu0 0.0
    %1899 = vmatpush1.msra.mxu0 0.0
    %1900 = vmatprep.subr.mxu0 0.0
    %1901 = vmatpush1.msra.mxu0 0.0
    %1902 = vmatprep.subr.mxu0 0.0
    %1903 = vmatpush1.msra.mxu0 0.0
    %1904 = vmatprep.subr.mxu0 0.0
    %1905 = vmatpush1.msra.mxu0 0.0
    %1906 = vmatprep.mubr.f32.mxu0 0.0
    %1907 = vmatmul.mubr.f32.gmra.mrb[0].mxu0 %v1828
    %v1908 = vpop.f32.mrb[0].mxu0
    %v1909 = vadd.f32 0.0, %v1908
    %v1910 = vpop.f32.mrb[0].mxu0
    %v1911 = vadd.f32 0.0, %v1910
    %1912 = vdwg.mxu0
    %1913 = vmatprep.subr.mxu0 %v1840
    %1914 = vmatpush1.msra.mxu0 %v1837
    %1915 = vmatprep.subr.mxu0 0.0
    %1916 = vmatpush1.msra.mxu0 0.0
    %1917 = vmatprep.subr.mxu0 0.0
    %1918 = vmatpush1.msra.mxu0 0.0
    %1919 = vmatprep.subr.mxu0 0.0
    %1920 = vmatpush1.msra.mxu0 0.0
    %1921 = vmatprep.subr.mxu0 0.0
    %1922 = vmatpush1.msra.mxu0 0.0
    %1923 = vmatprep.subr.mxu0 0.0
    %1924 = vmatpush1.msra.mxu0 0.0
    %1925 = vmatprep.subr.mxu0 0.0
    %1926 = vmatpush1.msra.mxu0 0.0
    %1927 = vmatprep.subr.mxu0 0.0
    %1928 = vmatpush1.msra.mxu0 0.0
    %1929 = vmatprep.subr.mxu0 0.0
    %1930 = vmatpush1.msra.mxu0 0.0
    %1931 = vmatprep.subr.mxu0 0.0
    %1932 = vmatpush1.msra.mxu0 0.0
    %1933 = vmatprep.subr.mxu0 0.0
    %1934 = vmatpush1.msra.mxu0 0.0
    %1935 = vmatprep.subr.mxu0 0.0
    %1936 = vmatpush1.msra.mxu0 0.0
    %1937 = vmatprep.subr.mxu0 0.0
    %1938 = vmatpush1.msra.mxu0 0.0
    %1939 = vmatprep.subr.mxu0 0.0
    %1940 = vmatpush1.msra.mxu0 0.0
    %1941 = vmatprep.subr.mxu0 0.0
    %1942 = vmatpush1.msra.mxu0 0.0
    %1943 = vmatprep.subr.mxu0 0.0
    %1944 = vmatpush1.msra.mxu0 0.0
    %1945 = vmatprep.subr.mxu0 0.0
    %1946 = vmatpush1.msra.mxu0 0.0
    %1947 = vmatprep.subr.mxu0 0.0
    %1948 = vmatpush1.msra.mxu0 0.0
    %1949 = vmatprep.subr.mxu0 0.0
    %1950 = vmatpush1.msra.mxu0 0.0
    %1951 = vmatprep.subr.mxu0 0.0
    %1952 = vmatpush1.msra.mxu0 0.0
    %1953 = vmatprep.subr.mxu0 0.0
    %1954 = vmatpush1.msra.mxu0 0.0
    %1955 = vmatprep.subr.mxu0 0.0
    %1956 = vmatpush1.msra.mxu0 0.0
    %1957 = vmatprep.subr.mxu0 0.0
    %1958 = vmatpush1.msra.mxu0 0.0
    %1959 = vmatprep.subr.mxu0 0.0
    %1960 = vmatpush1.msra.mxu0 0.0
    %1961 = vmatprep.subr.mxu0 0.0
    %1962 = vmatpush1.msra.mxu0 0.0
    %1963 = vmatprep.subr.mxu0 0.0
    %1964 = vmatpush1.msra.mxu0 0.0
    %1965 = vmatprep.subr.mxu0 0.0
    %1966 = vmatpush1.msra.mxu0 0.0
    %1967 = vmatprep.subr.mxu0 0.0
    %1968 = vmatpush1.msra.mxu0 0.0
    %1969 = vmatprep.subr.mxu0 0.0
    %1970 = vmatpush1.msra.mxu0 0.0
    %1971 = vmatprep.subr.mxu0 0.0
    %1972 = vmatpush1.msra.mxu0 0.0
    %1973 = vmatprep.subr.mxu0 0.0
    %1974 = vmatpush1.msra.mxu0 0.0
    %1975 = vmatprep.subr.mxu0 0.0
    %1976 = vmatpush1.msra.mxu0 0.0
    %1977 = vmatprep.mubr.f32.mxu0 0.0
    %1978 = vmatmul.mubr.f32.gmra.mrb[0].mxu0 %v1828
    %v1979 = vpop.f32.mrb[0].mxu0
    %v1980 = vadd.f32 0.0, %v1979
    %v1981 = vpop.f32.mrb[0].mxu0
    %v1982 = vadd.f32 0.0, %v1981
    %1983 = vdwg.mxu0
    %v1984 = vadd.f32 %v1788, %v1909
    %v1985 = vadd.f32 %v1789, %v1911
    %v1986 = vadd.f32 %v1790, %v1980
    %v1987 = vadd.f32 %v1791, %v1982
    %v1988 = vld [vmem:[%s5] sm:$0xf]
    %1990 = vset.pattern.permute.xlu0 0
    %1991 = vperm.xlu0 %1990, %v1988
    %v1992 = vpop.permute.xlu0 %1991
    %v1994 = vadd.f32 %v1984, %v1992
    %v1995 = vadd.f32 %v1985, %v1992
    %v1996 = vadd.f32 %v1986, %v1992
    %v1997 = vadd.f32 %v1987, %v1992
    %v1998 = vxor.u32 %v1994, 2147483648
    %v1999 = vxor.u32 %v1995, 2147483648
    %v2000 = vxor.u32 %v1996, 2147483648
    %v2001 = vxor.u32 %v1997, 2147483648
    %v2002 = vmul.f32 %v1998, 1.442695
    %v2003 = vpow.pop %v2002
    %v2004 = vmul.f32 %v1999, 1.442695
    %v2005 = vpow.pop %v2004
    %v2006 = vmul.f32 %v2000, 1.442695
    %v2007 = vpow.pop %v2006
    %v2008 = vmul.f32 %v2001, 1.442695
    %v2009 = vpow.pop %v2008
    %v2010 = vadd.f32 %v2003, 1.0
    %v2011 = vadd.f32 %v2005, 1.0
    %v2012 = vadd.f32 %v2007, 1.0
    %v2013 = vadd.f32 %v2009, 1.0
    %v2014 = vrcp.pop %v2010
    %v2015 = vmul.f32 1.0, %v2014
    %v2016 = vrcp.pop %v2011
    %v2017 = vmul.f32 1.0, %v2016
    %v2018 = vrcp.pop %v2012
    %v2019 = vmul.f32 1.0, %v2018
    %v2020 = vrcp.pop %v2013
    %v2021 = vmul.f32 1.0, %v2020
    %v2022 = vmul.f32 %v1994, %v2015
    %v2023 = vmul.f32 %v1995, %v2017
    %v2024 = vmul.f32 %v1996, %v2019
    %v2025 = vmul.f32 %v1997, %v2021
    %v2028 = vadd.f32 %v2022, %v38
    %v2029 = vadd.f32 %v2023, %v49
    %v2030 = vadd.f32 %v2024, %v39
    %v2031 = vadd.f32 %v2025, %v50
    %v2036 = vcombine.low %v2028, %v2029
    %v2037 = vcombine.low %v2030, %v2031
    %2040 = vst [vmem:[#allocation5] sm:$0xff] %v2036
    %2041 = vst [vmem:[#allocation5 + $0x8] sm:$0xff] %v2037
    // Predicated region
    $region30: #{tpu_custom_call.1} parent=1 // pred_check
      _
    $region31: #{tpu_custom_call.1} parent=1 // pred_check_branch
      %2043 = sbr.rel (0) target = $region33
    $region32: #{tpu_custom_call.1} parent=1 // pred_region
      %s2045 = ssub.s32 256, 256
      %2046 = vsyncadd [#allocation4], %s2045
      %s2048 = sshll.u32 [#allocation5], 4
      %s2049 = int_to_ptr.vmem [resolvable:$true] %s2048
      %2051 = dma.vmem_to_hbm [thread:$0]  %s2049, 256, %s6, [#allocation4]
    $region33: #{tpu_custom_call.1} parent=1 // pred_fallthru
      _
    // Predicated region
    $region34: #{tpu_custom_call.1} parent=1 // pred_check
      _
    $region35: #{tpu_custom_call.1} parent=1 // pred_check_branch
      %2053 = sbr.rel (0) target = $region37
    $region36: #{tpu_custom_call.1} parent=1 // pred_region
      %2054 = dma.done [#allocation4], 256
    $region37: #{tpu_custom_call.1} parent=1 // pred_fallthru
      _
    %2055 = vsyncpa [#allocation3], 1
    %2056 = vsyncpa [#allocation4], 1

</llo_original>
